<compile_context>
chip_gen: v6e
topology: v6e:2x2x1
jax: 0.10.0
libtpu: 0.0.40
codegen_flags: <defaults>
</compile_context>

<pallas_src>
import functools

import jax
import jax.numpy as jnp
from jax.experimental import pallas as pl
from jax.experimental.pallas import tpu as pltpu


def _layer_norm(h, gamma, beta, eps=1e-5):
    mu = jnp.mean(h, axis=-1, keepdims=True)
    var = jnp.mean((h - mu) ** 2, axis=-1, keepdims=True)
    return (h - mu) * jax.lax.rsqrt(var + eps) * gamma + beta


def _gelu_exact(x):
    # nn.GELU() default in PyTorch is the exact erf formulation.
    return 0.5 * x * (1.0 + jax.lax.erf(x * (1.0 / jnp.sqrt(jnp.float32(2.0)))))


def _decoder_block_kernel(
    num_heads, block_b,
    x_ref,
    wqkv_ref, bqkv_ref, wo_ref, bo_ref,
    g1_ref, be1_ref,
    w1_ref, bf1_ref, w2_ref, bf2_ref,
    g2_ref, be2_ref,
    o_ref,
):
    bb = block_b
    _, T, C = x_ref.shape
    N = num_heads
    D = C // N
    R = bb * T                                    # rows folded over (batch-block, seq)

    x = x_ref[...].reshape(R, C)                  # (R, C) f32

    # ---- fused QKV projection: one wide bf16 MXU matmul, f32 accumulation ----
    qkv = jnp.dot(x.astype(jnp.bfloat16), wqkv_ref[...],
                  preferred_element_type=jnp.float32) + bqkv_ref[...]   # (R, 3C)

    scale = 1.0 / jnp.sqrt(jnp.float32(D))
    q = qkv[:, 0 * C:1 * C] * scale               # fold 1/sqrt(D) into q
    k = qkv[:, 1 * C:2 * C]
    v = qkv[:, 2 * C:3 * C]

    # additive causal bias, computed once and reused for every head
    row = jax.lax.broadcasted_iota(jnp.int32, (T, T), 0)
    col = jax.lax.broadcasted_iota(jnp.int32, (T, T), 1)
    mask_bias = jnp.where(col > row, jnp.float32(-1e30), jnp.float32(0.0))[None, :, :]

    # ---- masked self-attention ----
    # Per-head attention, batched over the bb sequences of this block; the head
    # concatenation is folded into the output projection by accumulating
    # oh @ Wo[head] (no concatenate / relayout of head outputs).
    attn = jnp.zeros((R, C), jnp.float32)
    for n in range(N):                            # static loop, N is small
        sl = slice(n * D, (n + 1) * D)
        qh = q[:, sl].reshape(bb, T, D).astype(jnp.bfloat16)
        kh = k[:, sl].reshape(bb, T, D).astype(jnp.bfloat16)
        vh = v[:, sl].reshape(bb, T, D).astype(jnp.bfloat16)

        logits = jnp.einsum('bqd,bkd->bqk', qh, kh,
                            preferred_element_type=jnp.float32) + mask_bias
        logits = logits - jnp.max(logits, axis=-1, keepdims=True)
        p = jnp.exp(logits)
        p = p * pl.reciprocal(jnp.sum(p, axis=-1, keepdims=True), approx=True)

        oh = jnp.einsum('bqk,bkd->bqd', p.astype(jnp.bfloat16), vh,
                        preferred_element_type=jnp.float32)        # (bb, T, D)
        attn = attn + jnp.dot(oh.reshape(R, D).astype(jnp.bfloat16),
                              wo_ref[n],
                              preferred_element_type=jnp.float32)
    attn = attn + bo_ref[...]
    # attn_dropout / resid_dropout: identity at inference.

    # ---- residual + LayerNorm 1 (f32) ----
    x1 = _layer_norm(x + attn, g1_ref[...], be1_ref[...])

    # ---- MLP: bf16 matmuls, f32 accumulation, exact-erf GELU ----
    h = jnp.dot(x1.astype(jnp.bfloat16), w1_ref[...],
                preferred_element_type=jnp.float32) + bf1_ref[...]
    h = _gelu_exact(h)
    m = jnp.dot(h.astype(jnp.bfloat16), w2_ref[...],
                preferred_element_type=jnp.float32) + bf2_ref[...]
    # mlp dropout: identity at inference.

    # ---- residual + LayerNorm 2 ----
    out = _layer_norm(x1 + m, g2_ref[...], be2_ref[...])

    o_ref[...] = out.reshape(bb, T, C).astype(o_ref.dtype)


def _pick_block_b(B, T, target_rows=256):
    """Largest divisor of B whose block packs at most ~target_rows folded rows."""
    limit = max(1, target_rows // max(T, 1))
    bb = 1
    for cand in range(1, min(B, limit) + 1):
        if B % cand == 0:
            bb = cand
    return bb


def decoder_block(x, params, num_heads, *, block_b=None):
    """x: (B, T, C) float32. params: dict from init_params (bf16 matmul weights)."""
    B, T, C = x.shape
    H = params["w1"].shape[1]
    assert C % num_heads == 0
    assert params["wo"].shape[0] == num_heads

    bb = _pick_block_b(B, T) if block_b is None else block_b
    assert B % bb == 0

    def full_spec(arr):
        nd = arr.ndim
        return pl.BlockSpec(arr.shape, lambda i, _nd=nd: (0,) * _nd)

    in_specs = [
        pl.BlockSpec((bb, T, C), lambda i: (i, 0, 0)),           # x
        full_spec(params["wqkv"]), full_spec(params["bqkv"]),    # fused QKV
        full_spec(params["wo"]), full_spec(params["bo"]),        # output proj
        full_spec(params["g1"]), full_spec(params["be1"]),       # ln1
        full_spec(params["w1"]), full_spec(params["bf1"]),       # fc1
        full_spec(params["w2"]), full_spec(params["bf2"]),       # fc2
        full_spec(params["g2"]), full_spec(params["be2"]),       # ln2
    ]

    kernel = functools.partial(_decoder_block_kernel, num_heads, bb)

    # Explicit VMEM budget: double-buffered params + activation working set + slack,
    # clamped to 64 MiB so it stays inside v7x's physical VMEM.
    param_bytes = sum(int(p.size) * p.dtype.itemsize for p in params.values())
    act_bytes = bb * T * (3 * C + 4 * C + 2 * H) * 4 + bb * num_heads * T * T * 4
    vmem_limit = int(min(64 * 1024 * 1024,
                         max(32 * 1024 * 1024, 4 * (2 * param_bytes + 2 * act_bytes))))

    return pl.pallas_call(
        kernel,
        out_shape=jax.ShapeDtypeStruct((B, T, C), jnp.float32),
        grid_spec=pltpu.PrefetchScalarGridSpec(
            num_scalar_prefetch=0,
            grid=(B // bb,),
            in_specs=in_specs,
            out_specs=pl.BlockSpec((bb, T, C), lambda i: (i, 0, 0)),
        ),
        compiler_params=pltpu.CompilerParams(
            dimension_semantics=("parallel",),
            vmem_limit_bytes=vmem_limit,
        ),
    )(
        x,
        params["wqkv"], params["bqkv"], params["wo"], params["bo"],
        params["g1"], params["be1"],
        params["w1"], params["bf1"], params["w2"], params["bf2"],
        params["g2"], params["be2"],
    )


def init_params(key, h_dim, num_heads, mlp_ratio):
    """Deterministic synthetic parameters.
    Matmul weights are stored (in, out) in bf16 (f32 accumulation in-kernel).
    Q/K/V weights are fused into one (C, 3C) matrix; Wo is pre-reshaped to
    (num_heads, head_dim, h_dim) so the head concat folds into per-head
    output-projection accumulation inside the kernel.
    """
    H = mlp_ratio * h_dim
    D = h_dim // num_heads
    keys = jax.random.split(key, 4)
    s = 0.02

    def w(k, shape):
        return (s * jax.random.normal(k, shape, dtype=jnp.float32)).astype(jnp.bfloat16)

    return {
        "wqkv": w(keys[0], (h_dim, 3 * h_dim)),
        "bqkv": jnp.zeros((1, 3 * h_dim), jnp.float32),
        "wo": w(keys[1], (h_dim, h_dim)).reshape(num_heads, D, h_dim),
        "bo": jnp.zeros((1, h_dim), jnp.float32),
        "g1": jnp.ones((1, h_dim), jnp.float32),
        "be1": jnp.zeros((1, h_dim), jnp.float32),
        "w1": w(keys[2], (h_dim, H)),
        "bf1": jnp.zeros((1, H), jnp.float32),
        "w2": w(keys[3], (H, h_dim)),
        "bf2": jnp.zeros((1, h_dim), jnp.float32),
        "g2": jnp.ones((1, h_dim), jnp.float32),
        "be2": jnp.zeros((1, h_dim), jnp.float32),
    }


if __name__ == "__main__":
    # Small shapes consistent with the module: (B, T, C) token sequence.
    B, T, C = 2, 8, 32
    num_heads = 4
    mlp_ratio = 4

    key = jax.random.PRNGKey(0)
    kx, kp = jax.random.split(key)
    x = jax.random.normal(kx, (B, T, C), dtype=jnp.float32)
    params = init_params(kp, C, num_heads, mlp_ratio)

    out = decoder_block(x, params, num_heads)
    out = jax.block_until_ready(out)
    assert out.shape == (B, T, C)
    assert jnp.all(jnp.isfinite(out))
    print("KERNEL_OK")
</pallas_src>

<mosaic_0001>
module attributes {stable_mosaic.version = 11 : i64} {
  func.func @_decoder_block_kernel(%arg0: i32, %arg1: memref<2x8x32xf32, #tpu.memory_space<vmem>>, %arg2: memref<32x96xbf16, #tpu.memory_space<vmem>>, %arg3: memref<1x96xf32, #tpu.memory_space<vmem>>, %arg4: memref<4x8x32xbf16, #tpu.memory_space<vmem>>, %arg5: memref<1x32xf32, #tpu.memory_space<vmem>>, %arg6: memref<1x32xf32, #tpu.memory_space<vmem>>, %arg7: memref<1x32xf32, #tpu.memory_space<vmem>>, %arg8: memref<32x128xbf16, #tpu.memory_space<vmem>>, %arg9: memref<1x128xf32, #tpu.memory_space<vmem>>, %arg10: memref<128x32xbf16, #tpu.memory_space<vmem>>, %arg11: memref<1x32xf32, #tpu.memory_space<vmem>>, %arg12: memref<1x32xf32, #tpu.memory_space<vmem>>, %arg13: memref<1x32xf32, #tpu.memory_space<vmem>>, %arg14: memref<2x8x32xf32, #tpu.memory_space<vmem>>) attributes {dimension_semantics = [#tpu.dimension_semantics<parallel>], iteration_bounds = array<i64: 1>, scalar_prefetch = 0 : i64, scratch_operands = 0 : i64, tpu.core_type = #tpu.core_type<tc>, window_params = [{transform_indices = @transform_0, window_bounds = array<i64: 2, 8, 32>}, {pipeline_mode = #tpu.pipeline_mode<synchronous>, transform_indices = @transform_1, window_bounds = array<i64: 32, 96>}, {pipeline_mode = #tpu.pipeline_mode<synchronous>, transform_indices = @transform_2, window_bounds = array<i64: 1, 96>}, {pipeline_mode = #tpu.pipeline_mode<synchronous>, transform_indices = @transform_3, window_bounds = array<i64: 4, 8, 32>}, {pipeline_mode = #tpu.pipeline_mode<synchronous>, transform_indices = @transform_4, window_bounds = array<i64: 1, 32>}, {pipeline_mode = #tpu.pipeline_mode<synchronous>, transform_indices = @transform_5, window_bounds = array<i64: 1, 32>}, {pipeline_mode = #tpu.pipeline_mode<synchronous>, transform_indices = @transform_6, window_bounds = array<i64: 1, 32>}, {pipeline_mode = #tpu.pipeline_mode<synchronous>, transform_indices = @transform_7, window_bounds = array<i64: 32, 128>}, {pipeline_mode = #tpu.pipeline_mode<synchronous>, transform_indices = @transform_8, window_bounds = array<i64: 1, 128>}, {pipeline_mode = #tpu.pipeline_mode<synchronous>, transform_indices = @transform_9, window_bounds = array<i64: 128, 32>}, {pipeline_mode = #tpu.pipeline_mode<synchronous>, transform_indices = @transform_10, window_bounds = array<i64: 1, 32>}, {pipeline_mode = #tpu.pipeline_mode<synchronous>, transform_indices = @transform_11, window_bounds = array<i64: 1, 32>}, {pipeline_mode = #tpu.pipeline_mode<synchronous>, transform_indices = @transform_12, window_bounds = array<i64: 1, 32>}, {transform_indices = @transform_13, window_bounds = array<i64: 2, 8, 32>}]} {
    %c0 = arith.constant 0 : index
    %c0_0 = arith.constant 0 : index
    %c0_1 = arith.constant 0 : index
    %0 = vector.load %arg1[%c0, %c0_0, %c0_1] : memref<2x8x32xf32, #tpu.memory_space<vmem>>, vector<2x8x32xf32>
    %1 = vector.shape_cast %0 : vector<2x8x32xf32> to vector<16x32xf32>
    %2 = arith.truncf %1 : vector<16x32xf32> to vector<16x32xbf16>
    %c0_2 = arith.constant 0 : index
    %c0_3 = arith.constant 0 : index
    %3 = vector.load %arg2[%c0_2, %c0_3] : memref<32x96xbf16, #tpu.memory_space<vmem>>, vector<32x96xbf16>
    %cst = arith.constant dense<0.000000e+00> : vector<16x96xf32>
    %4 = tpu.matmul %2, %3, %cst {dimension_numbers = #tpu.dot_dimension_numbers<[1], [0], [0], [1], [0, 0, 1, 1], [], []>} : vector<16x32xbf16>, vector<32x96xbf16>, vector<16x96xf32> -> vector<16x96xf32>
    %c0_4 = arith.constant 0 : index
    %c0_5 = arith.constant 0 : index
    %5 = vector.load %arg3[%c0_4, %c0_5] : memref<1x96xf32, #tpu.memory_space<vmem>>, vector<1x96xf32>
    %6 = vector.broadcast %5 : vector<1x96xf32> to vector<16x96xf32>
    %7 = arith.addf %4, %6 : vector<16x96xf32>
    %cst_6 = arith.constant 8.000000e+00 : f32
    %8 = math.sqrt %cst_6 : f32
    %cst_7 = arith.constant 1.000000e+00 : f32
    %9 = arith.divf %cst_7, %8 : f32
    %10 = vector.extract_strided_slice %7 {offsets = [0, 0], sizes = [16, 32], strides = [1, 1]} : vector<16x96xf32> to vector<16x32xf32>
    %11 = vector.broadcast %9 : f32 to vector<16x32xf32>
    %12 = arith.mulf %10, %11 : vector<16x32xf32>
    %13 = vector.extract_strided_slice %7 {offsets = [0, 32], sizes = [16, 32], strides = [1, 1]} : vector<16x96xf32> to vector<16x32xf32>
    %14 = vector.extract_strided_slice %7 {offsets = [0, 64], sizes = [16, 32], strides = [1, 1]} : vector<16x96xf32> to vector<16x32xf32>
    %15 = tpu.iota {dimensions = array<i32: 0>} : vector<8x8xi32>
    %16 = tpu.iota {dimensions = array<i32: 1>} : vector<8x8xi32>
    %17 = arith.cmpi sgt, %16, %15 : vector<8x8xi32>
    %cst_8 = arith.constant -1.000000e+30 : f32
    %cst_9 = arith.constant 0.000000e+00 : f32
    %18 = vector.broadcast %cst_8 : f32 to vector<8x8xf32>
    %19 = vector.broadcast %cst_9 : f32 to vector<8x8xf32>
    %20 = arith.select %17, %18, %19 : vector<8x8xi1>, vector<8x8xf32>
    %21 = vector.shape_cast %20 : vector<8x8xf32> to vector<1x8x8xf32>
    %cst_10 = arith.constant 0.000000e+00 : f32
    %22 = vector.broadcast %cst_10 : f32 to vector<16x32xf32>
    %23 = vector.extract_strided_slice %12 {offsets = [0, 0], sizes = [16, 8], strides = [1, 1]} : vector<16x32xf32> to vector<16x8xf32>
    %24 = vector.shape_cast %23 : vector<16x8xf32> to vector<2x8x8xf32>
    %25 = arith.truncf %24 : vector<2x8x8xf32> to vector<2x8x8xbf16>
    %26 = vector.extract_strided_slice %13 {offsets = [0, 0], sizes = [16, 8], strides = [1, 1]} : vector<16x32xf32> to vector<16x8xf32>
    %27 = vector.shape_cast %26 : vector<16x8xf32> to vector<2x8x8xf32>
    %28 = arith.truncf %27 : vector<2x8x8xf32> to vector<2x8x8xbf16>
    %29 = vector.extract_strided_slice %14 {offsets = [0, 0], sizes = [16, 8], strides = [1, 1]} : vector<16x32xf32> to vector<16x8xf32>
    %30 = vector.shape_cast %29 : vector<16x8xf32> to vector<2x8x8xf32>
    %31 = arith.truncf %30 : vector<2x8x8xf32> to vector<2x8x8xbf16>
    "tpu.trace_start"() <{level = 10 : i32, message = "bqd,bkd->bqk"}> : () -> ()
    %cst_11 = arith.constant dense<0.000000e+00> : vector<2x8x8xf32>
    %32 = tpu.matmul %25, %28, %cst_11 {dimension_numbers = #tpu.dot_dimension_numbers<[2], [2], [1], [1], [0, 0, 0, 1, 1, 1], [0], [0]>} : vector<2x8x8xbf16>, vector<2x8x8xbf16>, vector<2x8x8xf32> -> vector<2x8x8xf32>
    "tpu.trace_stop"() : () -> ()
    %33 = vector.broadcast %21 : vector<1x8x8xf32> to vector<2x8x8xf32>
    %34 = arith.addf %32, %33 : vector<2x8x8xf32>
    %cst_12 = arith.constant dense<0xFF800000> : vector<2x8xf32>
    %35 = vector.multi_reduction <maximumf>, %34, %cst_12 [2] : vector<2x8x8xf32> to vector<2x8xf32>
    %36 = vector.shape_cast %35 : vector<2x8xf32> to vector<2x8x1xf32>
    %37 = vector.broadcast %36 : vector<2x8x1xf32> to vector<2x8x8xf32>
    %38 = arith.subf %34, %37 : vector<2x8x8xf32>
    %39 = math.exp %38 : vector<2x8x8xf32>
    %cst_13 = arith.constant dense<0.000000e+00> : vector<2x8xf32>
    %40 = vector.multi_reduction <add>, %39, %cst_13 [2] : vector<2x8x8xf32> to vector<2x8xf32>
    %41 = vector.shape_cast %40 : vector<2x8xf32> to vector<2x8x1xf32>
    %42 = tpu.reciprocal %41 {approx = true} : vector<2x8x1xf32> -> vector<2x8x1xf32>
    %43 = vector.broadcast %42 : vector<2x8x1xf32> to vector<2x8x8xf32>
    %44 = arith.mulf %39, %43 : vector<2x8x8xf32>
    %45 = arith.truncf %44 : vector<2x8x8xf32> to vector<2x8x8xbf16>
    "tpu.trace_start"() <{level = 10 : i32, message = "bqk,bkd->bqd"}> : () -> ()
    %cst_14 = arith.constant dense<0.000000e+00> : vector<2x8x8xf32>
    %46 = tpu.matmul %45, %31, %cst_14 {dimension_numbers = #tpu.dot_dimension_numbers<[2], [1], [1], [2], [0, 0, 0, 1, 1, 2], [0], [0]>} : vector<2x8x8xbf16>, vector<2x8x8xbf16>, vector<2x8x8xf32> -> vector<2x8x8xf32>
    "tpu.trace_stop"() : () -> ()
    %47 = vector.shape_cast %46 : vector<2x8x8xf32> to vector<16x8xf32>
    %48 = arith.truncf %47 : vector<16x8xf32> to vector<16x8xbf16>
    %c0_15 = arith.constant 0 : index
    %c0_16 = arith.constant 0 : index
    %c0_17 = arith.constant 0 : index
    %49 = vector.load %arg4[%c0_15, %c0_16, %c0_17] : memref<4x8x32xbf16, #tpu.memory_space<vmem>>, vector<1x8x32xbf16>
    %50 = vector.shape_cast %49 : vector<1x8x32xbf16> to vector<8x32xbf16>
    %cst_18 = arith.constant dense<0.000000e+00> : vector<16x32xf32>
    %51 = tpu.matmul %48, %50, %cst_18 {dimension_numbers = #tpu.dot_dimension_numbers<[1], [0], [0], [1], [0, 0, 1, 1], [], []>} : vector<16x8xbf16>, vector<8x32xbf16>, vector<16x32xf32> -> vector<16x32xf32>
    %52 = arith.addf %22, %51 : vector<16x32xf32>
    %53 = vector.extract_strided_slice %12 {offsets = [0, 8], sizes = [16, 8], strides = [1, 1]} : vector<16x32xf32> to vector<16x8xf32>
    %54 = vector.shape_cast %53 : vector<16x8xf32> to vector<2x8x8xf32>
    %55 = arith.truncf %54 : vector<2x8x8xf32> to vector<2x8x8xbf16>
    %56 = vector.extract_strided_slice %13 {offsets = [0, 8], sizes = [16, 8], strides = [1, 1]} : vector<16x32xf32> to vector<16x8xf32>
    %57 = vector.shape_cast %56 : vector<16x8xf32> to vector<2x8x8xf32>
    %58 = arith.truncf %57 : vector<2x8x8xf32> to vector<2x8x8xbf16>
    %59 = vector.extract_strided_slice %14 {offsets = [0, 8], sizes = [16, 8], strides = [1, 1]} : vector<16x32xf32> to vector<16x8xf32>
    %60 = vector.shape_cast %59 : vector<16x8xf32> to vector<2x8x8xf32>
    %61 = arith.truncf %60 : vector<2x8x8xf32> to vector<2x8x8xbf16>
    "tpu.trace_start"() <{level = 10 : i32, message = "bqd,bkd->bqk"}> : () -> ()
    %cst_19 = arith.constant dense<0.000000e+00> : vector<2x8x8xf32>
    %62 = tpu.matmul %55, %58, %cst_19 {dimension_numbers = #tpu.dot_dimension_numbers<[2], [2], [1], [1], [0, 0, 0, 1, 1, 1], [0], [0]>} : vector<2x8x8xbf16>, vector<2x8x8xbf16>, vector<2x8x8xf32> -> vector<2x8x8xf32>
    "tpu.trace_stop"() : () -> ()
    %63 = vector.broadcast %21 : vector<1x8x8xf32> to vector<2x8x8xf32>
    %64 = arith.addf %62, %63 : vector<2x8x8xf32>
    %cst_20 = arith.constant dense<0xFF800000> : vector<2x8xf32>
    %65 = vector.multi_reduction <maximumf>, %64, %cst_20 [2] : vector<2x8x8xf32> to vector<2x8xf32>
    %66 = vector.shape_cast %65 : vector<2x8xf32> to vector<2x8x1xf32>
    %67 = vector.broadcast %66 : vector<2x8x1xf32> to vector<2x8x8xf32>
    %68 = arith.subf %64, %67 : vector<2x8x8xf32>
    %69 = math.exp %68 : vector<2x8x8xf32>
    %cst_21 = arith.constant dense<0.000000e+00> : vector<2x8xf32>
    %70 = vector.multi_reduction <add>, %69, %cst_21 [2] : vector<2x8x8xf32> to vector<2x8xf32>
    %71 = vector.shape_cast %70 : vector<2x8xf32> to vector<2x8x1xf32>
    %72 = tpu.reciprocal %71 {approx = true} : vector<2x8x1xf32> -> vector<2x8x1xf32>
    %73 = vector.broadcast %72 : vector<2x8x1xf32> to vector<2x8x8xf32>
    %74 = arith.mulf %69, %73 : vector<2x8x8xf32>
    %75 = arith.truncf %74 : vector<2x8x8xf32> to vector<2x8x8xbf16>
    "tpu.trace_start"() <{level = 10 : i32, message = "bqk,bkd->bqd"}> : () -> ()
    %cst_22 = arith.constant dense<0.000000e+00> : vector<2x8x8xf32>
    %76 = tpu.matmul %75, %61, %cst_22 {dimension_numbers = #tpu.dot_dimension_numbers<[2], [1], [1], [2], [0, 0, 0, 1, 1, 2], [0], [0]>} : vector<2x8x8xbf16>, vector<2x8x8xbf16>, vector<2x8x8xf32> -> vector<2x8x8xf32>
    "tpu.trace_stop"() : () -> ()
    %77 = vector.shape_cast %76 : vector<2x8x8xf32> to vector<16x8xf32>
    %78 = arith.truncf %77 : vector<16x8xf32> to vector<16x8xbf16>
    %c1 = arith.constant 1 : index
    %c0_23 = arith.constant 0 : index
    %c0_24 = arith.constant 0 : index
    %79 = vector.load %arg4[%c1, %c0_23, %c0_24] : memref<4x8x32xbf16, #tpu.memory_space<vmem>>, vector<1x8x32xbf16>
    %80 = vector.shape_cast %79 : vector<1x8x32xbf16> to vector<8x32xbf16>
    %cst_25 = arith.constant dense<0.000000e+00> : vector<16x32xf32>
    %81 = tpu.matmul %78, %80, %cst_25 {dimension_numbers = #tpu.dot_dimension_numbers<[1], [0], [0], [1], [0, 0, 1, 1], [], []>} : vector<16x8xbf16>, vector<8x32xbf16>, vector<16x32xf32> -> vector<16x32xf32>
    %82 = arith.addf %52, %81 : vector<16x32xf32>
    %83 = vector.extract_strided_slice %12 {offsets = [0, 16], sizes = [16, 8], strides = [1, 1]} : vector<16x32xf32> to vector<16x8xf32>
    %84 = vector.shape_cast %83 : vector<16x8xf32> to vector<2x8x8xf32>
    %85 = arith.truncf %84 : vector<2x8x8xf32> to vector<2x8x8xbf16>
    %86 = vector.extract_strided_slice %13 {offsets = [0, 16], sizes = [16, 8], strides = [1, 1]} : vector<16x32xf32> to vector<16x8xf32>
    %87 = vector.shape_cast %86 : vector<16x8xf32> to vector<2x8x8xf32>
    %88 = arith.truncf %87 : vector<2x8x8xf32> to vector<2x8x8xbf16>
    %89 = vector.extract_strided_slice %14 {offsets = [0, 16], sizes = [16, 8], strides = [1, 1]} : vector<16x32xf32> to vector<16x8xf32>
    %90 = vector.shape_cast %89 : vector<16x8xf32> to vector<2x8x8xf32>
    %91 = arith.truncf %90 : vector<2x8x8xf32> to vector<2x8x8xbf16>
    "tpu.trace_start"() <{level = 10 : i32, message = "bqd,bkd->bqk"}> : () -> ()
    %cst_26 = arith.constant dense<0.000000e+00> : vector<2x8x8xf32>
    %92 = tpu.matmul %85, %88, %cst_26 {dimension_numbers = #tpu.dot_dimension_numbers<[2], [2], [1], [1], [0, 0, 0, 1, 1, 1], [0], [0]>} : vector<2x8x8xbf16>, vector<2x8x8xbf16>, vector<2x8x8xf32> -> vector<2x8x8xf32>
    "tpu.trace_stop"() : () -> ()
    %93 = vector.broadcast %21 : vector<1x8x8xf32> to vector<2x8x8xf32>
    %94 = arith.addf %92, %93 : vector<2x8x8xf32>
    %cst_27 = arith.constant dense<0xFF800000> : vector<2x8xf32>
    %95 = vector.multi_reduction <maximumf>, %94, %cst_27 [2] : vector<2x8x8xf32> to vector<2x8xf32>
    %96 = vector.shape_cast %95 : vector<2x8xf32> to vector<2x8x1xf32>
    %97 = vector.broadcast %96 : vector<2x8x1xf32> to vector<2x8x8xf32>
    %98 = arith.subf %94, %97 : vector<2x8x8xf32>
    %99 = math.exp %98 : vector<2x8x8xf32>
    %cst_28 = arith.constant dense<0.000000e+00> : vector<2x8xf32>
    %100 = vector.multi_reduction <add>, %99, %cst_28 [2] : vector<2x8x8xf32> to vector<2x8xf32>
    %101 = vector.shape_cast %100 : vector<2x8xf32> to vector<2x8x1xf32>
    %102 = tpu.reciprocal %101 {approx = true} : vector<2x8x1xf32> -> vector<2x8x1xf32>
    %103 = vector.broadcast %102 : vector<2x8x1xf32> to vector<2x8x8xf32>
    %104 = arith.mulf %99, %103 : vector<2x8x8xf32>
    %105 = arith.truncf %104 : vector<2x8x8xf32> to vector<2x8x8xbf16>
    "tpu.trace_start"() <{level = 10 : i32, message = "bqk,bkd->bqd"}> : () -> ()
    %cst_29 = arith.constant dense<0.000000e+00> : vector<2x8x8xf32>
    %106 = tpu.matmul %105, %91, %cst_29 {dimension_numbers = #tpu.dot_dimension_numbers<[2], [1], [1], [2], [0, 0, 0, 1, 1, 2], [0], [0]>} : vector<2x8x8xbf16>, vector<2x8x8xbf16>, vector<2x8x8xf32> -> vector<2x8x8xf32>
    "tpu.trace_stop"() : () -> ()
    %107 = vector.shape_cast %106 : vector<2x8x8xf32> to vector<16x8xf32>
    %108 = arith.truncf %107 : vector<16x8xf32> to vector<16x8xbf16>
    %c2 = arith.constant 2 : index
    %c0_30 = arith.constant 0 : index
    %c0_31 = arith.constant 0 : index
    %109 = vector.load %arg4[%c2, %c0_30, %c0_31] : memref<4x8x32xbf16, #tpu.memory_space<vmem>>, vector<1x8x32xbf16>
    %110 = vector.shape_cast %109 : vector<1x8x32xbf16> to vector<8x32xbf16>
    %cst_32 = arith.constant dense<0.000000e+00> : vector<16x32xf32>
    %111 = tpu.matmul %108, %110, %cst_32 {dimension_numbers = #tpu.dot_dimension_numbers<[1], [0], [0], [1], [0, 0, 1, 1], [], []>} : vector<16x8xbf16>, vector<8x32xbf16>, vector<16x32xf32> -> vector<16x32xf32>
    %112 = arith.addf %82, %111 : vector<16x32xf32>
    %113 = vector.extract_strided_slice %12 {offsets = [0, 24], sizes = [16, 8], strides = [1, 1]} : vector<16x32xf32> to vector<16x8xf32>
    %114 = vector.shape_cast %113 : vector<16x8xf32> to vector<2x8x8xf32>
    %115 = arith.truncf %114 : vector<2x8x8xf32> to vector<2x8x8xbf16>
    %116 = vector.extract_strided_slice %13 {offsets = [0, 24], sizes = [16, 8], strides = [1, 1]} : vector<16x32xf32> to vector<16x8xf32>
    %117 = vector.shape_cast %116 : vector<16x8xf32> to vector<2x8x8xf32>
    %118 = arith.truncf %117 : vector<2x8x8xf32> to vector<2x8x8xbf16>
    %119 = vector.extract_strided_slice %14 {offsets = [0, 24], sizes = [16, 8], strides = [1, 1]} : vector<16x32xf32> to vector<16x8xf32>
    %120 = vector.shape_cast %119 : vector<16x8xf32> to vector<2x8x8xf32>
    %121 = arith.truncf %120 : vector<2x8x8xf32> to vector<2x8x8xbf16>
    "tpu.trace_start"() <{level = 10 : i32, message = "bqd,bkd->bqk"}> : () -> ()
    %cst_33 = arith.constant dense<0.000000e+00> : vector<2x8x8xf32>
    %122 = tpu.matmul %115, %118, %cst_33 {dimension_numbers = #tpu.dot_dimension_numbers<[2], [2], [1], [1], [0, 0, 0, 1, 1, 1], [0], [0]>} : vector<2x8x8xbf16>, vector<2x8x8xbf16>, vector<2x8x8xf32> -> vector<2x8x8xf32>
    "tpu.trace_stop"() : () -> ()
    %123 = vector.broadcast %21 : vector<1x8x8xf32> to vector<2x8x8xf32>
    %124 = arith.addf %122, %123 : vector<2x8x8xf32>
    %cst_34 = arith.constant dense<0xFF800000> : vector<2x8xf32>
    %125 = vector.multi_reduction <maximumf>, %124, %cst_34 [2] : vector<2x8x8xf32> to vector<2x8xf32>
    %126 = vector.shape_cast %125 : vector<2x8xf32> to vector<2x8x1xf32>
    %127 = vector.broadcast %126 : vector<2x8x1xf32> to vector<2x8x8xf32>
    %128 = arith.subf %124, %127 : vector<2x8x8xf32>
    %129 = math.exp %128 : vector<2x8x8xf32>
    %cst_35 = arith.constant dense<0.000000e+00> : vector<2x8xf32>
    %130 = vector.multi_reduction <add>, %129, %cst_35 [2] : vector<2x8x8xf32> to vector<2x8xf32>
    %131 = vector.shape_cast %130 : vector<2x8xf32> to vector<2x8x1xf32>
    %132 = tpu.reciprocal %131 {approx = true} : vector<2x8x1xf32> -> vector<2x8x1xf32>
    %133 = vector.broadcast %132 : vector<2x8x1xf32> to vector<2x8x8xf32>
    %134 = arith.mulf %129, %133 : vector<2x8x8xf32>
    %135 = arith.truncf %134 : vector<2x8x8xf32> to vector<2x8x8xbf16>
    "tpu.trace_start"() <{level = 10 : i32, message = "bqk,bkd->bqd"}> : () -> ()
    %cst_36 = arith.constant dense<0.000000e+00> : vector<2x8x8xf32>
    %136 = tpu.matmul %135, %121, %cst_36 {dimension_numbers = #tpu.dot_dimension_numbers<[2], [1], [1], [2], [0, 0, 0, 1, 1, 2], [0], [0]>} : vector<2x8x8xbf16>, vector<2x8x8xbf16>, vector<2x8x8xf32> -> vector<2x8x8xf32>
    "tpu.trace_stop"() : () -> ()
    %137 = vector.shape_cast %136 : vector<2x8x8xf32> to vector<16x8xf32>
    %138 = arith.truncf %137 : vector<16x8xf32> to vector<16x8xbf16>
    %c3 = arith.constant 3 : index
    %c0_37 = arith.constant 0 : index
    %c0_38 = arith.constant 0 : index
    %139 = vector.load %arg4[%c3, %c0_37, %c0_38] : memref<4x8x32xbf16, #tpu.memory_space<vmem>>, vector<1x8x32xbf16>
    %140 = vector.shape_cast %139 : vector<1x8x32xbf16> to vector<8x32xbf16>
    %cst_39 = arith.constant dense<0.000000e+00> : vector<16x32xf32>
    %141 = tpu.matmul %138, %140, %cst_39 {dimension_numbers = #tpu.dot_dimension_numbers<[1], [0], [0], [1], [0, 0, 1, 1], [], []>} : vector<16x8xbf16>, vector<8x32xbf16>, vector<16x32xf32> -> vector<16x32xf32>
    %142 = arith.addf %112, %141 : vector<16x32xf32>
    %c0_40 = arith.constant 0 : index
    %c0_41 = arith.constant 0 : index
    %143 = vector.load %arg5[%c0_40, %c0_41] : memref<1x32xf32, #tpu.memory_space<vmem>>, vector<1x32xf32>
    %144 = vector.broadcast %143 : vector<1x32xf32> to vector<16x32xf32>
    %145 = arith.addf %142, %144 : vector<16x32xf32>
    %146 = arith.addf %1, %145 : vector<16x32xf32>
    %c0_42 = arith.constant 0 : index
    %c0_43 = arith.constant 0 : index
    %147 = vector.load %arg6[%c0_42, %c0_43] : memref<1x32xf32, #tpu.memory_space<vmem>>, vector<1x32xf32>
    %c0_44 = arith.constant 0 : index
    %c0_45 = arith.constant 0 : index
    %148 = vector.load %arg7[%c0_44, %c0_45] : memref<1x32xf32, #tpu.memory_space<vmem>>, vector<1x32xf32>
    %cst_46 = arith.constant dense<0.000000e+00> : vector<16xf32>
    %149 = vector.multi_reduction <add>, %146, %cst_46 [1] : vector<16x32xf32> to vector<16xf32>
    %150 = vector.shape_cast %149 : vector<16xf32> to vector<16x1xf32>
    %cst_47 = arith.constant 3.200000e+01 : f32
    %151 = vector.broadcast %cst_47 : f32 to vector<16x1xf32>
    %152 = arith.divf %150, %151 : vector<16x1xf32>
    %153 = vector.broadcast %152 : vector<16x1xf32> to vector<16x32xf32>
    %154 = arith.subf %146, %153 : vector<16x32xf32>
    %155 = arith.mulf %154, %154 : vector<16x32xf32>
    %cst_48 = arith.constant dense<0.000000e+00> : vector<16xf32>
    %156 = vector.multi_reduction <add>, %155, %cst_48 [1] : vector<16x32xf32> to vector<16xf32>
    %157 = vector.shape_cast %156 : vector<16xf32> to vector<16x1xf32>
    %cst_49 = arith.constant 3.200000e+01 : f32
    %158 = vector.broadcast %cst_49 : f32 to vector<16x1xf32>
    %159 = arith.divf %157, %158 : vector<16x1xf32>
    %160 = vector.broadcast %152 : vector<16x1xf32> to vector<16x32xf32>
    %161 = arith.subf %146, %160 : vector<16x32xf32>
    %cst_50 = arith.constant 9.99999974E-6 : f32
    %162 = vector.broadcast %cst_50 : f32 to vector<16x1xf32>
    %163 = arith.addf %159, %162 : vector<16x1xf32>
    %164 = math.rsqrt %163 : vector<16x1xf32>
    %165 = vector.broadcast %164 : vector<16x1xf32> to vector<16x32xf32>
    %166 = arith.mulf %161, %165 : vector<16x32xf32>
    %167 = vector.broadcast %147 : vector<1x32xf32> to vector<16x32xf32>
    %168 = arith.mulf %166, %167 : vector<16x32xf32>
    %169 = vector.broadcast %148 : vector<1x32xf32> to vector<16x32xf32>
    %170 = arith.addf %168, %169 : vector<16x32xf32>
    %171 = arith.truncf %170 : vector<16x32xf32> to vector<16x32xbf16>
    %c0_51 = arith.constant 0 : index
    %c0_52 = arith.constant 0 : index
    %172 = vector.load %arg8[%c0_51, %c0_52] : memref<32x128xbf16, #tpu.memory_space<vmem>>, vector<32x128xbf16>
    %cst_53 = arith.constant dense<0.000000e+00> : vector<16x128xf32>
    %173 = tpu.matmul %171, %172, %cst_53 {dimension_numbers = #tpu.dot_dimension_numbers<[1], [0], [0], [1], [0, 0, 1, 1], [], []>} : vector<16x32xbf16>, vector<32x128xbf16>, vector<16x128xf32> -> vector<16x128xf32>
    %c0_54 = arith.constant 0 : index
    %c0_55 = arith.constant 0 : index
    %174 = vector.load %arg9[%c0_54, %c0_55] : memref<1x128xf32, #tpu.memory_space<vmem>>, vector<1x128xf32>
    %175 = vector.broadcast %174 : vector<1x128xf32> to vector<16x128xf32>
    %176 = arith.addf %173, %175 : vector<16x128xf32>
    %cst_56 = arith.constant 5.000000e-01 : f32
    %177 = vector.broadcast %cst_56 : f32 to vector<16x128xf32>
    %178 = arith.mulf %177, %176 : vector<16x128xf32>
    %cst_57 = arith.constant 2.000000e+00 : f32
    %179 = math.sqrt %cst_57 : f32
    %cst_58 = arith.constant 1.000000e+00 : f32
    %180 = arith.divf %cst_58, %179 : f32
    %181 = vector.broadcast %180 : f32 to vector<16x128xf32>
    %182 = arith.mulf %176, %181 : vector<16x128xf32>
    %183 = math.erf %182 : vector<16x128xf32>
    %cst_59 = arith.constant 1.000000e+00 : f32
    %184 = vector.broadcast %cst_59 : f32 to vector<16x128xf32>
    %185 = arith.addf %184, %183 : vector<16x128xf32>
    %186 = arith.mulf %178, %185 : vector<16x128xf32>
    %187 = arith.truncf %186 : vector<16x128xf32> to vector<16x128xbf16>
    %c0_60 = arith.constant 0 : index
    %c0_61 = arith.constant 0 : index
    %188 = vector.load %arg10[%c0_60, %c0_61] : memref<128x32xbf16, #tpu.memory_space<vmem>>, vector<128x32xbf16>
    %cst_62 = arith.constant dense<0.000000e+00> : vector<16x32xf32>
    %189 = tpu.matmul %187, %188, %cst_62 {dimension_numbers = #tpu.dot_dimension_numbers<[1], [0], [0], [1], [0, 0, 1, 1], [], []>} : vector<16x128xbf16>, vector<128x32xbf16>, vector<16x32xf32> -> vector<16x32xf32>
    %c0_63 = arith.constant 0 : index
    %c0_64 = arith.constant 0 : index
    %190 = vector.load %arg11[%c0_63, %c0_64] : memref<1x32xf32, #tpu.memory_space<vmem>>, vector<1x32xf32>
    %191 = vector.broadcast %190 : vector<1x32xf32> to vector<16x32xf32>
    %192 = arith.addf %189, %191 : vector<16x32xf32>
    %193 = arith.addf %170, %192 : vector<16x32xf32>
    %c0_65 = arith.constant 0 : index
    %c0_66 = arith.constant 0 : index
    %194 = vector.load %arg12[%c0_65, %c0_66] : memref<1x32xf32, #tpu.memory_space<vmem>>, vector<1x32xf32>
    %c0_67 = arith.constant 0 : index
    %c0_68 = arith.constant 0 : index
    %195 = vector.load %arg13[%c0_67, %c0_68] : memref<1x32xf32, #tpu.memory_space<vmem>>, vector<1x32xf32>
    %cst_69 = arith.constant dense<0.000000e+00> : vector<16xf32>
    %196 = vector.multi_reduction <add>, %193, %cst_69 [1] : vector<16x32xf32> to vector<16xf32>
    %197 = vector.shape_cast %196 : vector<16xf32> to vector<16x1xf32>
    %cst_70 = arith.constant 3.200000e+01 : f32
    %198 = vector.broadcast %cst_70 : f32 to vector<16x1xf32>
    %199 = arith.divf %197, %198 : vector<16x1xf32>
    %200 = vector.broadcast %199 : vector<16x1xf32> to vector<16x32xf32>
    %201 = arith.subf %193, %200 : vector<16x32xf32>
    %202 = arith.mulf %201, %201 : vector<16x32xf32>
    %cst_71 = arith.constant dense<0.000000e+00> : vector<16xf32>
    %203 = vector.multi_reduction <add>, %202, %cst_71 [1] : vector<16x32xf32> to vector<16xf32>
    %204 = vector.shape_cast %203 : vector<16xf32> to vector<16x1xf32>
    %cst_72 = arith.constant 3.200000e+01 : f32
    %205 = vector.broadcast %cst_72 : f32 to vector<16x1xf32>
    %206 = arith.divf %204, %205 : vector<16x1xf32>
    %207 = vector.broadcast %199 : vector<16x1xf32> to vector<16x32xf32>
    %208 = arith.subf %193, %207 : vector<16x32xf32>
    %cst_73 = arith.constant 9.99999974E-6 : f32
    %209 = vector.broadcast %cst_73 : f32 to vector<16x1xf32>
    %210 = arith.addf %206, %209 : vector<16x1xf32>
    %211 = math.rsqrt %210 : vector<16x1xf32>
    %212 = vector.broadcast %211 : vector<16x1xf32> to vector<16x32xf32>
    %213 = arith.mulf %208, %212 : vector<16x32xf32>
    %214 = vector.broadcast %194 : vector<1x32xf32> to vector<16x32xf32>
    %215 = arith.mulf %213, %214 : vector<16x32xf32>
    %216 = vector.broadcast %195 : vector<1x32xf32> to vector<16x32xf32>
    %217 = arith.addf %215, %216 : vector<16x32xf32>
    %218 = vector.shape_cast %217 : vector<16x32xf32> to vector<2x8x32xf32>
    %c0_74 = arith.constant 0 : index
    %c0_75 = arith.constant 0 : index
    %c0_76 = arith.constant 0 : index
    %219 = vector.load %arg14[%c0_74, %c0_75, %c0_76] : memref<2x8x32xf32, #tpu.memory_space<vmem>>, vector<2x8x32xf32>
    tpu.vector_store %arg14[%c0_74, %c0_75, %c0_76], %218 {strides = array<i32>} : memref<2x8x32xf32, #tpu.memory_space<vmem>>, vector<2x8x32xf32>,
    return
  }
  func.func @transform_0(%arg0: i32) -> (i32, i32, i32) {
    %c0_i32 = arith.constant 0 : i32
    %c0_i32_0 = arith.constant 0 : i32
    %c0_i32_1 = arith.constant 0 : i32
    return %arg0, %c0_i32, %c0_i32_0 : i32, i32, i32
  }
  func.func @transform_1(%arg0: i32) -> (i32, i32) {
    %c0_i32 = arith.constant 0 : i32
    %c0_i32_0 = arith.constant 0 : i32
    %c0_i32_1 = arith.constant 0 : i32
    return %c0_i32, %c0_i32_0 : i32, i32
  }
  func.func @transform_2(%arg0: i32) -> (i32, i32) {
    %c0_i32 = arith.constant 0 : i32
    %c0_i32_0 = arith.constant 0 : i32
    %c0_i32_1 = arith.constant 0 : i32
    return %c0_i32, %c0_i32_0 : i32, i32
  }
  func.func @transform_3(%arg0: i32) -> (i32, i32, i32) {
    %c0_i32 = arith.constant 0 : i32
    %c0_i32_0 = arith.constant 0 : i32
    %c0_i32_1 = arith.constant 0 : i32
    %c0_i32_2 = arith.constant 0 : i32
    return %c0_i32, %c0_i32_0, %c0_i32_1 : i32, i32, i32
  }
  func.func @transform_4(%arg0: i32) -> (i32, i32) {
    %c0_i32 = arith.constant 0 : i32
    %c0_i32_0 = arith.constant 0 : i32
    %c0_i32_1 = arith.constant 0 : i32
    return %c0_i32, %c0_i32_0 : i32, i32
  }
  func.func @transform_5(%arg0: i32) -> (i32, i32) {
    %c0_i32 = arith.constant 0 : i32
    %c0_i32_0 = arith.constant 0 : i32
    %c0_i32_1 = arith.constant 0 : i32
    return %c0_i32, %c0_i32_0 : i32, i32
  }
  func.func @transform_6(%arg0: i32) -> (i32, i32) {
    %c0_i32 = arith.constant 0 : i32
    %c0_i32_0 = arith.constant 0 : i32
    %c0_i32_1 = arith.constant 0 : i32
    return %c0_i32, %c0_i32_0 : i32, i32
  }
  func.func @transform_7(%arg0: i32) -> (i32, i32) {
    %c0_i32 = arith.constant 0 : i32
    %c0_i32_0 = arith.constant 0 : i32
    %c0_i32_1 = arith.constant 0 : i32
    return %c0_i32, %c0_i32_0 : i32, i32
  }
  func.func @transform_8(%arg0: i32) -> (i32, i32) {
    %c0_i32 = arith.constant 0 : i32
    %c0_i32_0 = arith.constant 0 : i32
    %c0_i32_1 = arith.constant 0 : i32
    return %c0_i32, %c0_i32_0 : i32, i32
  }
  func.func @transform_9(%arg0: i32) -> (i32, i32) {
    %c0_i32 = arith.constant 0 : i32
    %c0_i32_0 = arith.constant 0 : i32
    %c0_i32_1 = arith.constant 0 : i32
    return %c0_i32, %c0_i32_0 : i32, i32
  }
  func.func @transform_10(%arg0: i32) -> (i32, i32) {
    %c0_i32 = arith.constant 0 : i32
    %c0_i32_0 = arith.constant 0 : i32
    %c0_i32_1 = arith.constant 0 : i32
    return %c0_i32, %c0_i32_0 : i32, i32
  }
  func.func @transform_11(%arg0: i32) -> (i32, i32) {
    %c0_i32 = arith.constant 0 : i32
    %c0_i32_0 = arith.constant 0 : i32
    %c0_i32_1 = arith.constant 0 : i32
    return %c0_i32, %c0_i32_0 : i32, i32
  }
  func.func @transform_12(%arg0: i32) -> (i32, i32) {
    %c0_i32 = arith.constant 0 : i32
    %c0_i32_0 = arith.constant 0 : i32
    %c0_i32_1 = arith.constant 0 : i32
    return %c0_i32, %c0_i32_0 : i32, i32
  }
  func.func @transform_13(%arg0: i32) -> (i32, i32, i32) {
    %c0_i32 = arith.constant 0 : i32
    %c0_i32_0 = arith.constant 0 : i32
    %c0_i32_1 = arith.constant 0 : i32
    return %arg0, %c0_i32, %c0_i32_0 : i32, i32, i32
  }
}

</mosaic_0001>

<llo_original>
// kernel: tpu_custom_call.1
$region0: #{tpu_custom_call.1}
  #allocation0 [shape = 'u32[]', space=smem, size = 0x4, offset = 0x4, fixed_abs, tag = 'smem constant byte address 0x4 - core index']
  #allocation1 [shape = 'u32[144,128]{1,0:T(1,128)}', space=vmem, size = 0x12000, scoped, tag = 'internal scratch']
  %s0 = inlined_call_operand.vmem [shape: f32[2,8,32], index: 0, kind: input, shape index: {}]
  %s1 = inlined_call_operand.vmem [shape: bf16[32,96], index: 1, kind: input, shape index: {}]
  %s2 = inlined_call_operand.vmem [shape: f32[1,96], index: 2, kind: input, shape index: {}]
  %s3 = inlined_call_operand.vmem [shape: bf16[4,8,32], index: 3, kind: input, shape index: {}]
  %s4 = inlined_call_operand.vmem [shape: f32[1,32], index: 4, kind: input, shape index: {}]
  %s5 = inlined_call_operand.vmem [shape: f32[1,32], index: 5, kind: input, shape index: {}]
  %s6 = inlined_call_operand.vmem [shape: f32[1,32], index: 6, kind: input, shape index: {}]
  %s7 = inlined_call_operand.vmem [shape: bf16[32,128], index: 7, kind: input, shape index: {}]
  %s8 = inlined_call_operand.vmem [shape: f32[1,128], index: 8, kind: input, shape index: {}]
  %s9 = inlined_call_operand.vmem [shape: bf16[128,32], index: 9, kind: input, shape index: {}]
  %s10 = inlined_call_operand.vmem [shape: f32[1,32], index: 10, kind: input, shape index: {}]
  %s11 = inlined_call_operand.vmem [shape: f32[1,32], index: 11, kind: input, shape index: {}]
  %s12 = inlined_call_operand.vmem [shape: f32[1,32], index: 12, kind: input, shape index: {}]
  %s13 = inlined_call_operand.hbm [shape: f32[2,8,32], index: 13, kind: output, shape index: {}]
  %s14 = sld [smem:[#allocation0]]
  $region62: #{tpu_custom_call.1} parent=0
    _
  %s16 = ssub.s32 1, %s14
  %s17 = scalar_select 0, %s16, %s14
  $region1: #{tpu_custom_call.1} parent=0
    #allocation2 [shape = 'u8[8192]{0}', space=vmem, size = 0x2000, scoped, tag = 'output window, operand 0, single buffered']
    #allocation3 [shape = 's32[1]{0}', space=sflag, size = 0x4, scoped, tag = 'scoped memory for tpu_custom_call.1']
    %18 = vsyncpa [#allocation3], 0
    // Predicated region
    $region2: #{tpu_custom_call.1} parent=1 // pred_check
      _
    $region3: #{tpu_custom_call.1} parent=1 // pred_check_branch
      %20 = sbr.rel (0) target = $region5
    $region4: #{tpu_custom_call.1} parent=1 // pred_region
      _
    $region5: #{tpu_custom_call.1} parent=1 // pred_fallthru
      _
    // Predicated region
    $region6: #{tpu_custom_call.1} parent=1 // pred_check
      _
    $region7: #{tpu_custom_call.1} parent=1 // pred_check_branch
      %22 = sbr.rel (0) target = $region9
    $region8: #{tpu_custom_call.1} parent=1 // pred_region
      _
    $region9: #{tpu_custom_call.1} parent=1 // pred_fallthru
      _
    // Predicated region
    $region10: #{tpu_custom_call.1} parent=1 // pred_check
      _
    $region11: #{tpu_custom_call.1} parent=1 // pred_check_branch
      %24 = sbr.rel (0) target = $region13
    $region12: #{tpu_custom_call.1} parent=1 // pred_region
      _
    $region13: #{tpu_custom_call.1} parent=1 // pred_fallthru
      _
    // Predicated region
    $region14: #{tpu_custom_call.1} parent=1 // pred_check
      _
    $region15: #{tpu_custom_call.1} parent=1 // pred_check_branch
      %26 = sbr.rel (0) target = $region17
    $region16: #{tpu_custom_call.1} parent=1 // pred_region
      _
    $region17: #{tpu_custom_call.1} parent=1 // pred_fallthru
      _
    // Predicated region
    $region18: #{tpu_custom_call.1} parent=1 // pred_check
      _
    $region19: #{tpu_custom_call.1} parent=1 // pred_check_branch
      %28 = sbr.rel (0) target = $region21
    $region20: #{tpu_custom_call.1} parent=1 // pred_region
      _
    $region21: #{tpu_custom_call.1} parent=1 // pred_fallthru
      _
    // Predicated region
    $region22: #{tpu_custom_call.1} parent=1 // pred_check
      _
    $region23: #{tpu_custom_call.1} parent=1 // pred_check_branch
      %30 = sbr.rel (0) target = $region25
    $region24: #{tpu_custom_call.1} parent=1 // pred_region
      _
    $region25: #{tpu_custom_call.1} parent=1 // pred_fallthru
      _
    // Predicated region
    $region26: #{tpu_custom_call.1} parent=1 // pred_check
      _
    $region27: #{tpu_custom_call.1} parent=1 // pred_check_branch
      %32 = sbr.rel (0) target = $region29
    $region28: #{tpu_custom_call.1} parent=1 // pred_region
      _
    $region29: #{tpu_custom_call.1} parent=1 // pred_fallthru
      _
    // Predicated region
    $region30: #{tpu_custom_call.1} parent=1 // pred_check
      _
    $region31: #{tpu_custom_call.1} parent=1 // pred_check_branch
      %34 = sbr.rel (0) target = $region33
    $region32: #{tpu_custom_call.1} parent=1 // pred_region
      _
    $region33: #{tpu_custom_call.1} parent=1 // pred_fallthru
      _
    // Predicated region
    $region34: #{tpu_custom_call.1} parent=1 // pred_check
      _
    $region35: #{tpu_custom_call.1} parent=1 // pred_check_branch
      %36 = sbr.rel (0) target = $region37
    $region36: #{tpu_custom_call.1} parent=1 // pred_region
      _
    $region37: #{tpu_custom_call.1} parent=1 // pred_fallthru
      _
    // Predicated region
    $region38: #{tpu_custom_call.1} parent=1 // pred_check
      _
    $region39: #{tpu_custom_call.1} parent=1 // pred_check_branch
      %38 = sbr.rel (0) target = $region41
    $region40: #{tpu_custom_call.1} parent=1 // pred_region
      _
    $region41: #{tpu_custom_call.1} parent=1 // pred_fallthru
      _
    // Predicated region
    $region42: #{tpu_custom_call.1} parent=1 // pred_check
      _
    $region43: #{tpu_custom_call.1} parent=1 // pred_check_branch
      %40 = sbr.rel (0) target = $region45
    $region44: #{tpu_custom_call.1} parent=1 // pred_region
      _
    $region45: #{tpu_custom_call.1} parent=1 // pred_fallthru
      _
    // Predicated region
    $region46: #{tpu_custom_call.1} parent=1 // pred_check
      _
    $region47: #{tpu_custom_call.1} parent=1 // pred_check_branch
      %42 = sbr.rel (0) target = $region49
    $region48: #{tpu_custom_call.1} parent=1 // pred_region
      _
    $region49: #{tpu_custom_call.1} parent=1 // pred_fallthru
      _
    // Predicated region
    $region50: #{tpu_custom_call.1} parent=1 // pred_check
      _
    $region51: #{tpu_custom_call.1} parent=1 // pred_check_branch
      %44 = sbr.rel (0) target = $region53
    $region52: #{tpu_custom_call.1} parent=1 // pred_region
      _
    $region53: #{tpu_custom_call.1} parent=1 // pred_fallthru
      _
    %v46 = vld [vmem:[%s0] sm:$0xff]
    %v47 = vld [vmem:[%s0 + $0x8] sm:$0xff]
    %v48 = vpack.c.bf16 %v47, %v46
    %v49 = vld [vmem:[%s1] sm:$0xf]
    %v50 = vld [vmem:[%s1 + $0x4] sm:$0xf]
    %v51 = vld [vmem:[%s1 + $0x8] sm:$0xf]
    %v52 = vld [vmem:[%s1 + $0xc] sm:$0xf]
    %v53 = vld [vmem:[%s2] sm:$0x1]
    %v55 = vlaneseq
    %v56 = vshrl.u32 %v55, 7
    %v57 = vsub.s32 0, %v56
    %v58 = vrot.slane %v53, %v57
    %v64 = vunpack.c.l.b16 %v49
    %v65 = vunpack.c.l.b16 %v50
    %v66 = vunpack.c.l.b16 %v51
    %v67 = vunpack.c.l.b16 %v52
    %v68 = vpack.c.b16 %v65, %v64
    %v69 = vpack.c.b16 %v67, %v66
    %vm72 = vcmask 261120
    %v74 = vsel %vm72, %v48, 0
    %76 = vmatprep.subr.bf16.mxu0 0
    %77 = vmatpush1.bf16.msra.mxu0 0
    %78 = vmatprep.subr.bf16.mxu0 0
    %79 = vmatpush1.bf16.msra.mxu0 0
    %80 = vmatprep.subr.bf16.mxu0 0
    %81 = vmatpush1.bf16.msra.mxu0 0
    %82 = vmatprep.subr.bf16.mxu0 0
    %83 = vmatpush1.bf16.msra.mxu0 0
    %84 = vmatprep.subr.bf16.mxu0 0
    %85 = vmatpush1.bf16.msra.mxu0 0
    %86 = vmatprep.subr.bf16.mxu0 0
    %87 = vmatpush1.bf16.msra.mxu0 0
    %88 = vmatprep.subr.bf16.mxu0 0
    %89 = vmatpush1.bf16.msra.mxu0 %v69
    %90 = vmatprep.subr.bf16.mxu0 0
    %91 = vmatpush1.bf16.msra.mxu0 %v68
    %92 = vmatprep.subr.bf16.mxu0 0
    %93 = vmatpush2.bf16.msra.mxu0 0
    %94 = vmatprep.subr.bf16.mxu0 0
    %95 = vmatpush2.bf16.msra.mxu0 0
    %96 = vmatprep.subr.bf16.mxu0 0
    %97 = vmatpush2.bf16.msra.mxu0 0
    %98 = vmatprep.subr.bf16.mxu0 0
    %99 = vmatpush2.bf16.msra.mxu0 0
    %100 = vmatprep.subr.bf16.mxu0 0
    %101 = vmatpush2.bf16.msra.mxu0 0
    %102 = vmatprep.subr.bf16.mxu0 0
    %103 = vmatpush2.bf16.msra.mxu0 0
    %104 = vmatprep.subr.bf16.mxu0 0
    %105 = vmatpush2.bf16.msra.mxu0 0
    %106 = vmatprep.subr.bf16.mxu0 0
    %107 = vmatpush2.bf16.msra.mxu0 0
    %108 = vmatprep.mubr.bf16.mxu0 0
    %109 = vmatmul.mubr.bf16.gmra.mxu0 %v74
    %v110 = vpop.f32.mrf.mxu0
    %v111 = vadd.f32 %v58, %v110
    %v112 = vpop.f32.mrf.mxu0
    %v113 = vpop.f32.mrf.mxu0
    %v114 = vadd.f32 %v58, %v113
    %v115 = vpop.f32.mrf.mxu0
    %116 = vdwg.mxu0
    %v117 = vmul.f32 %v111, 0.35355338
    %v118 = vmul.f32 %v114, 0.35355338
    %v119 = vlaneseq
    %v120 = vshrl.u32 %v119, 7
    %v121 = vlaneseq
    %v122 = vand.u32 %v121, 127
    %vm123 = vcmp.gt.s32.totalorder %v122, %v120
    %v124 = vsel %vm123, -1e+30, 0.0
    %v125 = vpack.c.bf16 %v117, %v117
    %v126 = vpack.c.bf16 %v118, %v118
    %v127 = vpack.c.bf16 %v111, %v111
    %v128 = vpack.c.bf16 %v114, %v114
    %130 = vrot.lane.b32.xlu0 %v127, 96
    %v131 = vpop.permute.xlu0 %130
    %vm132 = vcmask 64512
    %v134 = vsel %vm132, %v125, 0
    %v137 = vsel %vm132, %v131, 0
    %139 = vmatprep.subr.bf16.mxu0 0
    %140 = vmatpush1.bf16.xpose.msra.mxu0 0
    %141 = vmatprep.subr.bf16.mxu0 0
    %142 = vmatpush1.bf16.xpose.msra.mxu0 0
    %143 = vmatprep.subr.bf16.mxu0 0
    %144 = vmatpush1.bf16.xpose.msra.mxu0 0
    %145 = vmatprep.subr.bf16.mxu0 0
    %146 = vmatpush1.bf16.xpose.msra.mxu0 0
    %147 = vmatprep.subr.bf16.mxu0 0
    %148 = vmatpush1.bf16.xpose.msra.mxu0 0
    %149 = vmatprep.subr.bf16.mxu0 0
    %150 = vmatpush1.bf16.xpose.msra.mxu0 0
    %151 = vmatprep.subr.bf16.mxu0 0
    %152 = vmatpush1.bf16.xpose.msra.mxu0 0
    %153 = vmatprep.subr.bf16.mxu0 0
    %154 = vmatpush1.bf16.xpose.msra.mxu0 %v137
    %155 = vmatprep.subr.bf16.mxu0 0
    %156 = vmatpush2.bf16.xpose.msra.mxu0 0
    %157 = vmatprep.subr.bf16.mxu0 0
    %158 = vmatpush2.bf16.xpose.msra.mxu0 0
    %159 = vmatprep.subr.bf16.mxu0 0
    %160 = vmatpush2.bf16.xpose.msra.mxu0 0
    %161 = vmatprep.subr.bf16.mxu0 0
    %162 = vmatpush2.bf16.xpose.msra.mxu0 0
    %163 = vmatprep.subr.bf16.mxu0 0
    %164 = vmatpush2.bf16.xpose.msra.mxu0 0
    %165 = vmatprep.subr.bf16.mxu0 0
    %166 = vmatpush2.bf16.xpose.msra.mxu0 0
    %167 = vmatprep.subr.bf16.mxu0 0
    %168 = vmatpush2.bf16.xpose.msra.mxu0 0
    %169 = vmatprep.subr.bf16.mxu0 0
    %170 = vmatpush2.bf16.xpose.msra.mxu0 0
    %171 = vmatprep.mubr.bf16.mxu0 0
    %172 = vmatmul.mubr.bf16.gmra.mxu0 %v134
    %v173 = vpop.f32.mrf.mxu0
    %v174 = vadd.f32 %v124, %v173
    %v175 = vpop.f32.mrf.mxu0
    %v176 = vpop.f32.mrf.mxu0
    %v177 = vpop.f32.mrf.mxu0
    %178 = vdwg.mxu0
    %180 = vrot.lane.b32.xlu0 %v128, 96
    %v181 = vpop.permute.xlu0 %180
    %v183 = vsel %vm132, %v126, 0
    %v186 = vsel %vm132, %v181, 0
    %188 = vmatprep.subr.bf16.mxu0 0
    %189 = vmatpush1.bf16.xpose.msra.mxu0 0
    %190 = vmatprep.subr.bf16.mxu0 0
    %191 = vmatpush1.bf16.xpose.msra.mxu0 0
    %192 = vmatprep.subr.bf16.mxu0 0
    %193 = vmatpush1.bf16.xpose.msra.mxu0 0
    %194 = vmatprep.subr.bf16.mxu0 0
    %195 = vmatpush1.bf16.xpose.msra.mxu0 0
    %196 = vmatprep.subr.bf16.mxu0 0
    %197 = vmatpush1.bf16.xpose.msra.mxu0 0
    %198 = vmatprep.subr.bf16.mxu0 0
    %199 = vmatpush1.bf16.xpose.msra.mxu0 0
    %200 = vmatprep.subr.bf16.mxu0 0
    %201 = vmatpush1.bf16.xpose.msra.mxu0 0
    %202 = vmatprep.subr.bf16.mxu0 0
    %203 = vmatpush1.bf16.xpose.msra.mxu0 %v186
    %204 = vmatprep.subr.bf16.mxu0 0
    %205 = vmatpush2.bf16.xpose.msra.mxu0 0
    %206 = vmatprep.subr.bf16.mxu0 0
    %207 = vmatpush2.bf16.xpose.msra.mxu0 0
    %208 = vmatprep.subr.bf16.mxu0 0
    %209 = vmatpush2.bf16.xpose.msra.mxu0 0
    %210 = vmatprep.subr.bf16.mxu0 0
    %211 = vmatpush2.bf16.xpose.msra.mxu0 0
    %212 = vmatprep.subr.bf16.mxu0 0
    %213 = vmatpush2.bf16.xpose.msra.mxu0 0
    %214 = vmatprep.subr.bf16.mxu0 0
    %215 = vmatpush2.bf16.xpose.msra.mxu0 0
    %216 = vmatprep.subr.bf16.mxu0 0
    %217 = vmatpush2.bf16.xpose.msra.mxu0 0
    %218 = vmatprep.subr.bf16.mxu0 0
    %219 = vmatpush2.bf16.xpose.msra.mxu0 0
    %220 = vmatprep.mubr.bf16.mxu0 0
    %221 = vmatmul.mubr.bf16.gmra.mxu0 %v183
    %v222 = vpop.f32.mrf.mxu0
    %v223 = vadd.f32 %v124, %v222
    %v224 = vpop.f32.mrf.mxu0
    %v225 = vpop.f32.mrf.mxu0
    %v226 = vpop.f32.mrf.mxu0
    %227 = vdwg.mxu0
    %v228 = vsel %vm132, %v174, -inf
    %229 = vmax.xlane.f32.xlu0 %v228
    %v230 = vpop.xlane.xlu0 %229
    %v231 = vsel %vm132, %v223, -inf
    %232 = vmax.xlane.f32.xlu0 %v231
    %v233 = vpop.xlane.xlu0 %232
    %v234 = vsub.f32 %v174, %v230
    %v235 = vsub.f32 %v223, %v233
    %v236 = vmul.f32 %v234, 1.442695
    %v237 = vpow.pop %v236
    %v238 = vmul.f32 %v235, 1.442695
    %v239 = vpow.pop %v238
    %v240 = vsel %vm132, %v237, 0.0
    %241 = vadd.xlane.f32.xlu0 %v240
    %v242 = vpop.xlane.xlu0 %241
    %v243 = vsel %vm132, %v239, 0.0
    %244 = vadd.xlane.f32.xlu0 %v243
    %v245 = vpop.xlane.xlu0 %244
    %v246 = vrcp.pop %v242
    %v247 = vrcp.pop %v245
    %v248 = vmul.f32 %v237, %v246
    %v249 = vmul.f32 %v239, %v247
    %v250 = vpack.c.bf16 %v248, %v248
    %v251 = vpack.c.bf16 %v249, %v249
    %252 = vrot.lane.b32.xlu0 %v127, 64
    %v253 = vpop.permute.xlu0 %252
    %v255 = vsel %vm132, %v250, 0
    %vm257 = vcmask 1043456
    %v259 = vsel %vm257, %v253, 0
    %261 = vmatprep.subr.bf16.mxu0 0
    %262 = vmatpush1.bf16.msra.mxu0 0
    %263 = vmatprep.subr.bf16.mxu0 0
    %264 = vmatpush1.bf16.msra.mxu0 0
    %265 = vmatprep.subr.bf16.mxu0 0
    %266 = vmatpush1.bf16.msra.mxu0 0
    %267 = vmatprep.subr.bf16.mxu0 0
    %268 = vmatpush1.bf16.msra.mxu0 0
    %269 = vmatprep.subr.bf16.mxu0 0
    %270 = vmatpush1.bf16.msra.mxu0 0
    %271 = vmatprep.subr.bf16.mxu0 0
    %272 = vmatpush1.bf16.msra.mxu0 0
    %273 = vmatprep.subr.bf16.mxu0 0
    %274 = vmatpush1.bf16.msra.mxu0 0
    %275 = vmatprep.subr.bf16.mxu0 0
    %276 = vmatpush1.bf16.msra.mxu0 %v259
    %277 = vmatprep.subr.bf16.mxu0 0
    %278 = vmatpush2.bf16.msra.mxu0 0
    %279 = vmatprep.subr.bf16.mxu0 0
    %280 = vmatpush2.bf16.msra.mxu0 0
    %281 = vmatprep.subr.bf16.mxu0 0
    %282 = vmatpush2.bf16.msra.mxu0 0
    %283 = vmatprep.subr.bf16.mxu0 0
    %284 = vmatpush2.bf16.msra.mxu0 0
    %285 = vmatprep.subr.bf16.mxu0 0
    %286 = vmatpush2.bf16.msra.mxu0 0
    %287 = vmatprep.subr.bf16.mxu0 0
    %288 = vmatpush2.bf16.msra.mxu0 0
    %289 = vmatprep.subr.bf16.mxu0 0
    %290 = vmatpush2.bf16.msra.mxu0 0
    %291 = vmatprep.subr.bf16.mxu0 0
    %292 = vmatpush2.bf16.msra.mxu0 0
    %293 = vmatprep.mubr.bf16.mxu0 0
    %294 = vmatmul.mubr.bf16.gmra.mxu0 %v255
    %v295 = vpop.f32.mrf.mxu0
    %v296 = vadd.f32 0.0, %v295
    %v297 = vpop.f32.mrf.mxu0
    %v298 = vpop.f32.mrf.mxu0
    %v299 = vpop.f32.mrf.mxu0
    %300 = vdwg.mxu0
    %301 = vrot.lane.b32.xlu0 %v128, 64
    %v302 = vpop.permute.xlu0 %301
    %v304 = vsel %vm132, %v251, 0
    %v307 = vsel %vm257, %v302, 0
    %309 = vmatprep.subr.bf16.mxu0 0
    %310 = vmatpush1.bf16.msra.mxu0 0
    %311 = vmatprep.subr.bf16.mxu0 0
    %312 = vmatpush1.bf16.msra.mxu0 0
    %313 = vmatprep.subr.bf16.mxu0 0
    %314 = vmatpush1.bf16.msra.mxu0 0
    %315 = vmatprep.subr.bf16.mxu0 0
    %316 = vmatpush1.bf16.msra.mxu0 0
    %317 = vmatprep.subr.bf16.mxu0 0
    %318 = vmatpush1.bf16.msra.mxu0 0
    %319 = vmatprep.subr.bf16.mxu0 0
    %320 = vmatpush1.bf16.msra.mxu0 0
    %321 = vmatprep.subr.bf16.mxu0 0
    %322 = vmatpush1.bf16.msra.mxu0 0
    %323 = vmatprep.subr.bf16.mxu0 0
    %324 = vmatpush1.bf16.msra.mxu0 %v307
    %325 = vmatprep.subr.bf16.mxu0 0
    %326 = vmatpush2.bf16.msra.mxu0 0
    %327 = vmatprep.subr.bf16.mxu0 0
    %328 = vmatpush2.bf16.msra.mxu0 0
    %329 = vmatprep.subr.bf16.mxu0 0
    %330 = vmatpush2.bf16.msra.mxu0 0
    %331 = vmatprep.subr.bf16.mxu0 0
    %332 = vmatpush2.bf16.msra.mxu0 0
    %333 = vmatprep.subr.bf16.mxu0 0
    %334 = vmatpush2.bf16.msra.mxu0 0
    %335 = vmatprep.subr.bf16.mxu0 0
    %336 = vmatpush2.bf16.msra.mxu0 0
    %337 = vmatprep.subr.bf16.mxu0 0
    %338 = vmatpush2.bf16.msra.mxu0 0
    %339 = vmatprep.subr.bf16.mxu0 0
    %340 = vmatpush2.bf16.msra.mxu0 0
    %341 = vmatprep.mubr.bf16.mxu0 0
    %342 = vmatmul.mubr.bf16.gmra.mxu0 %v304
    %v343 = vpop.f32.mrf.mxu0
    %v344 = vadd.f32 0.0, %v343
    %v345 = vpop.f32.mrf.mxu0
    %v346 = vpop.f32.mrf.mxu0
    %v347 = vpop.f32.mrf.mxu0
    %348 = vdwg.mxu0
    %v349 = vpack.c.bf16 %v344, %v296
    %v350 = vld [vmem:[%s3] sm:$0xf]
    %352 = vrot.lane.b32.xlu0 %v125, 120
    %v353 = vpop.permute.xlu0 %352
    %354 = vrot.lane.b32.xlu0 %v127, 88
    %v355 = vpop.permute.xlu0 %354
    %v357 = vsel %vm132, %v353, 0
    %v360 = vsel %vm132, %v355, 0
    %362 = vmatprep.subr.bf16.mxu0 0
    %363 = vmatpush1.bf16.xpose.msra.mxu0 0
    %364 = vmatprep.subr.bf16.mxu0 0
    %365 = vmatpush1.bf16.xpose.msra.mxu0 0
    %366 = vmatprep.subr.bf16.mxu0 0
    %367 = vmatpush1.bf16.xpose.msra.mxu0 0
    %368 = vmatprep.subr.bf16.mxu0 0
    %369 = vmatpush1.bf16.xpose.msra.mxu0 0
    %370 = vmatprep.subr.bf16.mxu0 0
    %371 = vmatpush1.bf16.xpose.msra.mxu0 0
    %372 = vmatprep.subr.bf16.mxu0 0
    %373 = vmatpush1.bf16.xpose.msra.mxu0 0
    %374 = vmatprep.subr.bf16.mxu0 0
    %375 = vmatpush1.bf16.xpose.msra.mxu0 0
    %376 = vmatprep.subr.bf16.mxu0 0
    %377 = vmatpush1.bf16.xpose.msra.mxu0 %v360
    %378 = vmatprep.subr.bf16.mxu0 0
    %379 = vmatpush2.bf16.xpose.msra.mxu0 0
    %380 = vmatprep.subr.bf16.mxu0 0
    %381 = vmatpush2.bf16.xpose.msra.mxu0 0
    %382 = vmatprep.subr.bf16.mxu0 0
    %383 = vmatpush2.bf16.xpose.msra.mxu0 0
    %384 = vmatprep.subr.bf16.mxu0 0
    %385 = vmatpush2.bf16.xpose.msra.mxu0 0
    %386 = vmatprep.subr.bf16.mxu0 0
    %387 = vmatpush2.bf16.xpose.msra.mxu0 0
    %388 = vmatprep.subr.bf16.mxu0 0
    %389 = vmatpush2.bf16.xpose.msra.mxu0 0
    %390 = vmatprep.subr.bf16.mxu0 0
    %391 = vmatpush2.bf16.xpose.msra.mxu0 0
    %392 = vmatprep.subr.bf16.mxu0 0
    %393 = vmatpush2.bf16.xpose.msra.mxu0 0
    %394 = vmatprep.mubr.bf16.mxu0 0
    %395 = vmatmul.mubr.bf16.gmra.mxu0 %v357
    %v396 = vpop.f32.mrf.mxu0
    %v397 = vadd.f32 %v124, %v396
    %v398 = vpop.f32.mrf.mxu0
    %v399 = vpop.f32.mrf.mxu0
    %v400 = vpop.f32.mrf.mxu0
    %401 = vdwg.mxu0
    %403 = vrot.lane.b32.xlu0 %v126, 120
    %v404 = vpop.permute.xlu0 %403
    %405 = vrot.lane.b32.xlu0 %v128, 88
    %v406 = vpop.permute.xlu0 %405
    %v408 = vsel %vm132, %v404, 0
    %v411 = vsel %vm132, %v406, 0
    %413 = vmatprep.subr.bf16.mxu0 0
    %414 = vmatpush1.bf16.xpose.msra.mxu0 0
    %415 = vmatprep.subr.bf16.mxu0 0
    %416 = vmatpush1.bf16.xpose.msra.mxu0 0
    %417 = vmatprep.subr.bf16.mxu0 0
    %418 = vmatpush1.bf16.xpose.msra.mxu0 0
    %419 = vmatprep.subr.bf16.mxu0 0
    %420 = vmatpush1.bf16.xpose.msra.mxu0 0
    %421 = vmatprep.subr.bf16.mxu0 0
    %422 = vmatpush1.bf16.xpose.msra.mxu0 0
    %423 = vmatprep.subr.bf16.mxu0 0
    %424 = vmatpush1.bf16.xpose.msra.mxu0 0
    %425 = vmatprep.subr.bf16.mxu0 0
    %426 = vmatpush1.bf16.xpose.msra.mxu0 0
    %427 = vmatprep.subr.bf16.mxu0 0
    %428 = vmatpush1.bf16.xpose.msra.mxu0 %v411
    %429 = vmatprep.subr.bf16.mxu0 0
    %430 = vmatpush2.bf16.xpose.msra.mxu0 0
    %431 = vmatprep.subr.bf16.mxu0 0
    %432 = vmatpush2.bf16.xpose.msra.mxu0 0
    %433 = vmatprep.subr.bf16.mxu0 0
    %434 = vmatpush2.bf16.xpose.msra.mxu0 0
    %435 = vmatprep.subr.bf16.mxu0 0
    %436 = vmatpush2.bf16.xpose.msra.mxu0 0
    %437 = vmatprep.subr.bf16.mxu0 0
    %438 = vmatpush2.bf16.xpose.msra.mxu0 0
    %439 = vmatprep.subr.bf16.mxu0 0
    %440 = vmatpush2.bf16.xpose.msra.mxu0 0
    %441 = vmatprep.subr.bf16.mxu0 0
    %442 = vmatpush2.bf16.xpose.msra.mxu0 0
    %443 = vmatprep.subr.bf16.mxu0 0
    %444 = vmatpush2.bf16.xpose.msra.mxu0 0
    %445 = vmatprep.mubr.bf16.mxu0 0
    %446 = vmatmul.mubr.bf16.gmra.mxu0 %v408
    %v447 = vpop.f32.mrf.mxu0
    %v448 = vadd.f32 %v124, %v447
    %v449 = vpop.f32.mrf.mxu0
    %v450 = vpop.f32.mrf.mxu0
    %v451 = vpop.f32.mrf.mxu0
    %452 = vdwg.mxu0
    %v453 = vsel %vm132, %v397, -inf
    %454 = vmax.xlane.f32.xlu0 %v453
    %v455 = vpop.xlane.xlu0 %454
    %v456 = vsel %vm132, %v448, -inf
    %457 = vmax.xlane.f32.xlu0 %v456
    %v458 = vpop.xlane.xlu0 %457
    %v459 = vsub.f32 %v397, %v455
    %v460 = vsub.f32 %v448, %v458
    %v461 = vmul.f32 %v459, 1.442695
    %v462 = vpow.pop %v461
    %v463 = vmul.f32 %v460, 1.442695
    %v464 = vpow.pop %v463
    %v465 = vsel %vm132, %v462, 0.0
    %466 = vadd.xlane.f32.xlu0 %v465
    %v467 = vpop.xlane.xlu0 %466
    %v468 = vsel %vm132, %v464, 0.0
    %469 = vadd.xlane.f32.xlu0 %v468
    %v470 = vpop.xlane.xlu0 %469
    %v471 = vrcp.pop %v467
    %v472 = vrcp.pop %v470
    %v473 = vmul.f32 %v462, %v471
    %v474 = vmul.f32 %v464, %v472
    %v475 = vpack.c.bf16 %v473, %v473
    %v476 = vpack.c.bf16 %v474, %v474
    %477 = vrot.lane.b32.xlu0 %v127, 56
    %v478 = vpop.permute.xlu0 %477
    %v480 = vsel %vm132, %v475, 0
    %v483 = vsel %vm257, %v478, 0
    %485 = vmatprep.subr.bf16.mxu0 0
    %486 = vmatpush1.bf16.msra.mxu0 0
    %487 = vmatprep.subr.bf16.mxu0 0
    %488 = vmatpush1.bf16.msra.mxu0 0
    %489 = vmatprep.subr.bf16.mxu0 0
    %490 = vmatpush1.bf16.msra.mxu0 0
    %491 = vmatprep.subr.bf16.mxu0 0
    %492 = vmatpush1.bf16.msra.mxu0 0
    %493 = vmatprep.subr.bf16.mxu0 0
    %494 = vmatpush1.bf16.msra.mxu0 0
    %495 = vmatprep.subr.bf16.mxu0 0
    %496 = vmatpush1.bf16.msra.mxu0 0
    %497 = vmatprep.subr.bf16.mxu0 0
    %498 = vmatpush1.bf16.msra.mxu0 0
    %499 = vmatprep.subr.bf16.mxu0 0
    %500 = vmatpush1.bf16.msra.mxu0 %v483
    %501 = vmatprep.subr.bf16.mxu0 0
    %502 = vmatpush2.bf16.msra.mxu0 0
    %503 = vmatprep.subr.bf16.mxu0 0
    %504 = vmatpush2.bf16.msra.mxu0 0
    %505 = vmatprep.subr.bf16.mxu0 0
    %506 = vmatpush2.bf16.msra.mxu0 0
    %507 = vmatprep.subr.bf16.mxu0 0
    %508 = vmatpush2.bf16.msra.mxu0 0
    %509 = vmatprep.subr.bf16.mxu0 0
    %510 = vmatpush2.bf16.msra.mxu0 0
    %511 = vmatprep.subr.bf16.mxu0 0
    %512 = vmatpush2.bf16.msra.mxu0 0
    %513 = vmatprep.subr.bf16.mxu0 0
    %514 = vmatpush2.bf16.msra.mxu0 0
    %515 = vmatprep.subr.bf16.mxu0 0
    %516 = vmatpush2.bf16.msra.mxu0 0
    %517 = vmatprep.mubr.bf16.mxu0 0
    %518 = vmatmul.mubr.bf16.gmra.mxu0 %v480
    %v519 = vpop.f32.mrf.mxu0
    %v520 = vadd.f32 0.0, %v519
    %v521 = vpop.f32.mrf.mxu0
    %v522 = vpop.f32.mrf.mxu0
    %v523 = vpop.f32.mrf.mxu0
    %524 = vdwg.mxu0
    %525 = vrot.lane.b32.xlu0 %v128, 56
    %v526 = vpop.permute.xlu0 %525
    %v528 = vsel %vm132, %v476, 0
    %v531 = vsel %vm257, %v526, 0
    %533 = vmatprep.subr.bf16.mxu0 0
    %534 = vmatpush1.bf16.msra.mxu0 0
    %535 = vmatprep.subr.bf16.mxu0 0
    %536 = vmatpush1.bf16.msra.mxu0 0
    %537 = vmatprep.subr.bf16.mxu0 0
    %538 = vmatpush1.bf16.msra.mxu0 0
    %539 = vmatprep.subr.bf16.mxu0 0
    %540 = vmatpush1.bf16.msra.mxu0 0
    %541 = vmatprep.subr.bf16.mxu0 0
    %542 = vmatpush1.bf16.msra.mxu0 0
    %543 = vmatprep.subr.bf16.mxu0 0
    %544 = vmatpush1.bf16.msra.mxu0 0
    %545 = vmatprep.subr.bf16.mxu0 0
    %546 = vmatpush1.bf16.msra.mxu0 0
    %547 = vmatprep.subr.bf16.mxu0 0
    %548 = vmatpush1.bf16.msra.mxu0 %v531
    %549 = vmatprep.subr.bf16.mxu0 0
    %550 = vmatpush2.bf16.msra.mxu0 0
    %551 = vmatprep.subr.bf16.mxu0 0
    %552 = vmatpush2.bf16.msra.mxu0 0
    %553 = vmatprep.subr.bf16.mxu0 0
    %554 = vmatpush2.bf16.msra.mxu0 0
    %555 = vmatprep.subr.bf16.mxu0 0
    %556 = vmatpush2.bf16.msra.mxu0 0
    %557 = vmatprep.subr.bf16.mxu0 0
    %558 = vmatpush2.bf16.msra.mxu0 0
    %559 = vmatprep.subr.bf16.mxu0 0
    %560 = vmatpush2.bf16.msra.mxu0 0
    %561 = vmatprep.subr.bf16.mxu0 0
    %562 = vmatpush2.bf16.msra.mxu0 0
    %563 = vmatprep.subr.bf16.mxu0 0
    %564 = vmatpush2.bf16.msra.mxu0 0
    %565 = vmatprep.mubr.bf16.mxu0 0
    %566 = vmatmul.mubr.bf16.gmra.mxu0 %v528
    %v567 = vpop.f32.mrf.mxu0
    %v568 = vadd.f32 0.0, %v567
    %v569 = vpop.f32.mrf.mxu0
    %v570 = vpop.f32.mrf.mxu0
    %v571 = vpop.f32.mrf.mxu0
    %572 = vdwg.mxu0
    %v573 = vpack.c.bf16 %v568, %v520
    %s574 = scalar_lea.vmem %s3, 4
    %v575 = vld [vmem:[%s574] sm:$0xf]
    %v577 = vsel %vm132, %v573, 0
    %v580 = vsel %vm257, %v575, 0
    %582 = vmatprep.subr.bf16.mxu0 0
    %583 = vmatpush1.bf16.msra.mxu0 0
    %584 = vmatprep.subr.bf16.mxu0 0
    %585 = vmatpush1.bf16.msra.mxu0 0
    %586 = vmatprep.subr.bf16.mxu0 0
    %587 = vmatpush1.bf16.msra.mxu0 0
    %588 = vmatprep.subr.bf16.mxu0 0
    %589 = vmatpush1.bf16.msra.mxu0 0
    %590 = vmatprep.subr.bf16.mxu0 0
    %591 = vmatpush1.bf16.msra.mxu0 0
    %592 = vmatprep.subr.bf16.mxu0 0
    %593 = vmatpush1.bf16.msra.mxu0 0
    %594 = vmatprep.subr.bf16.mxu0 0
    %595 = vmatpush1.bf16.msra.mxu0 0
    %596 = vmatprep.subr.bf16.mxu0 0
    %597 = vmatpush1.bf16.msra.mxu0 %v580
    %598 = vmatprep.subr.bf16.mxu0 0
    %599 = vmatpush2.bf16.msra.mxu0 0
    %600 = vmatprep.subr.bf16.mxu0 0
    %601 = vmatpush2.bf16.msra.mxu0 0
    %602 = vmatprep.subr.bf16.mxu0 0
    %603 = vmatpush2.bf16.msra.mxu0 0
    %604 = vmatprep.subr.bf16.mxu0 0
    %605 = vmatpush2.bf16.msra.mxu0 0
    %606 = vmatprep.subr.bf16.mxu0 0
    %607 = vmatpush2.bf16.msra.mxu0 0
    %608 = vmatprep.subr.bf16.mxu0 0
    %609 = vmatpush2.bf16.msra.mxu0 0
    %610 = vmatprep.subr.bf16.mxu0 0
    %611 = vmatpush2.bf16.msra.mxu0 0
    %612 = vmatprep.subr.bf16.mxu0 0
    %613 = vmatpush2.bf16.msra.mxu0 0
    %614 = vmatprep.mubr.bf16.mxu0 0
    %615 = vmatmul.mubr.bf16.gmra.mxu0 %v577
    %v616 = vpop.f32.mrf.mxu0
    %v617 = vadd.f32 0.0, %v616
    %v618 = vpop.f32.mrf.mxu0
    %v619 = vpop.f32.mrf.mxu0
    %v620 = vadd.f32 0.0, %v619
    %v621 = vpop.f32.mrf.mxu0
    %622 = vdwg.mxu0
    %v624 = vsel %vm132, %v349, 0
    %v627 = vsel %vm257, %v350, 0
    %629 = vmatprep.subr.bf16.mxu0 0
    %630 = vmatpush1.bf16.msra.mxu0 0
    %631 = vmatprep.subr.bf16.mxu0 0
    %632 = vmatpush1.bf16.msra.mxu0 0
    %633 = vmatprep.subr.bf16.mxu0 0
    %634 = vmatpush1.bf16.msra.mxu0 0
    %635 = vmatprep.subr.bf16.mxu0 0
    %636 = vmatpush1.bf16.msra.mxu0 0
    %637 = vmatprep.subr.bf16.mxu0 0
    %638 = vmatpush1.bf16.msra.mxu0 0
    %639 = vmatprep.subr.bf16.mxu0 0
    %640 = vmatpush1.bf16.msra.mxu0 0
    %641 = vmatprep.subr.bf16.mxu0 0
    %642 = vmatpush1.bf16.msra.mxu0 0
    %643 = vmatprep.subr.bf16.mxu0 0
    %644 = vmatpush1.bf16.msra.mxu0 %v627
    %645 = vmatprep.subr.bf16.mxu0 0
    %646 = vmatpush2.bf16.msra.mxu0 0
    %647 = vmatprep.subr.bf16.mxu0 0
    %648 = vmatpush2.bf16.msra.mxu0 0
    %649 = vmatprep.subr.bf16.mxu0 0
    %650 = vmatpush2.bf16.msra.mxu0 0
    %651 = vmatprep.subr.bf16.mxu0 0
    %652 = vmatpush2.bf16.msra.mxu0 0
    %653 = vmatprep.subr.bf16.mxu0 0
    %654 = vmatpush2.bf16.msra.mxu0 0
    %655 = vmatprep.subr.bf16.mxu0 0
    %656 = vmatpush2.bf16.msra.mxu0 0
    %657 = vmatprep.subr.bf16.mxu0 0
    %658 = vmatpush2.bf16.msra.mxu0 0
    %659 = vmatprep.subr.bf16.mxu0 0
    %660 = vmatpush2.bf16.msra.mxu0 0
    %661 = vmatprep.mubr.bf16.mxu0 0
    %662 = vmatmul.mubr.bf16.gmra.mxu0 %v624
    %v663 = vpop.f32.mrf.mxu0
    %v664 = vadd.f32 %v617, %v663
    %v665 = vpop.f32.mrf.mxu0
    %v666 = vpop.f32.mrf.mxu0
    %v667 = vadd.f32 %v620, %v666
    %v668 = vpop.f32.mrf.mxu0
    %669 = vdwg.mxu0
    %670 = vrot.lane.b32.xlu0 %v125, 112
    %v671 = vpop.permute.xlu0 %670
    %672 = vrot.lane.b32.xlu0 %v127, 80
    %v673 = vpop.permute.xlu0 %672
    %v675 = vsel %vm132, %v671, 0
    %v678 = vsel %vm132, %v673, 0
    %680 = vmatprep.subr.bf16.mxu0 0
    %681 = vmatpush1.bf16.xpose.msra.mxu0 0
    %682 = vmatprep.subr.bf16.mxu0 0
    %683 = vmatpush1.bf16.xpose.msra.mxu0 0
    %684 = vmatprep.subr.bf16.mxu0 0
    %685 = vmatpush1.bf16.xpose.msra.mxu0 0
    %686 = vmatprep.subr.bf16.mxu0 0
    %687 = vmatpush1.bf16.xpose.msra.mxu0 0
    %688 = vmatprep.subr.bf16.mxu0 0
    %689 = vmatpush1.bf16.xpose.msra.mxu0 0
    %690 = vmatprep.subr.bf16.mxu0 0
    %691 = vmatpush1.bf16.xpose.msra.mxu0 0
    %692 = vmatprep.subr.bf16.mxu0 0
    %693 = vmatpush1.bf16.xpose.msra.mxu0 0
    %694 = vmatprep.subr.bf16.mxu0 0
    %695 = vmatpush1.bf16.xpose.msra.mxu0 %v678
    %696 = vmatprep.subr.bf16.mxu0 0
    %697 = vmatpush2.bf16.xpose.msra.mxu0 0
    %698 = vmatprep.subr.bf16.mxu0 0
    %699 = vmatpush2.bf16.xpose.msra.mxu0 0
    %700 = vmatprep.subr.bf16.mxu0 0
    %701 = vmatpush2.bf16.xpose.msra.mxu0 0
    %702 = vmatprep.subr.bf16.mxu0 0
    %703 = vmatpush2.bf16.xpose.msra.mxu0 0
    %704 = vmatprep.subr.bf16.mxu0 0
    %705 = vmatpush2.bf16.xpose.msra.mxu0 0
    %706 = vmatprep.subr.bf16.mxu0 0
    %707 = vmatpush2.bf16.xpose.msra.mxu0 0
    %708 = vmatprep.subr.bf16.mxu0 0
    %709 = vmatpush2.bf16.xpose.msra.mxu0 0
    %710 = vmatprep.subr.bf16.mxu0 0
    %711 = vmatpush2.bf16.xpose.msra.mxu0 0
    %712 = vmatprep.mubr.bf16.mxu0 0
    %713 = vmatmul.mubr.bf16.gmra.mxu0 %v675
    %v714 = vpop.f32.mrf.mxu0
    %v715 = vadd.f32 %v124, %v714
    %v716 = vpop.f32.mrf.mxu0
    %v717 = vpop.f32.mrf.mxu0
    %v718 = vpop.f32.mrf.mxu0
    %719 = vdwg.mxu0
    %720 = vrot.lane.b32.xlu0 %v126, 112
    %v721 = vpop.permute.xlu0 %720
    %722 = vrot.lane.b32.xlu0 %v128, 80
    %v723 = vpop.permute.xlu0 %722
    %v725 = vsel %vm132, %v721, 0
    %v728 = vsel %vm132, %v723, 0
    %730 = vmatprep.subr.bf16.mxu0 0
    %731 = vmatpush1.bf16.xpose.msra.mxu0 0
    %732 = vmatprep.subr.bf16.mxu0 0
    %733 = vmatpush1.bf16.xpose.msra.mxu0 0
    %734 = vmatprep.subr.bf16.mxu0 0
    %735 = vmatpush1.bf16.xpose.msra.mxu0 0
    %736 = vmatprep.subr.bf16.mxu0 0
    %737 = vmatpush1.bf16.xpose.msra.mxu0 0
    %738 = vmatprep.subr.bf16.mxu0 0
    %739 = vmatpush1.bf16.xpose.msra.mxu0 0
    %740 = vmatprep.subr.bf16.mxu0 0
    %741 = vmatpush1.bf16.xpose.msra.mxu0 0
    %742 = vmatprep.subr.bf16.mxu0 0
    %743 = vmatpush1.bf16.xpose.msra.mxu0 0
    %744 = vmatprep.subr.bf16.mxu0 0
    %745 = vmatpush1.bf16.xpose.msra.mxu0 %v728
    %746 = vmatprep.subr.bf16.mxu0 0
    %747 = vmatpush2.bf16.xpose.msra.mxu0 0
    %748 = vmatprep.subr.bf16.mxu0 0
    %749 = vmatpush2.bf16.xpose.msra.mxu0 0
    %750 = vmatprep.subr.bf16.mxu0 0
    %751 = vmatpush2.bf16.xpose.msra.mxu0 0
    %752 = vmatprep.subr.bf16.mxu0 0
    %753 = vmatpush2.bf16.xpose.msra.mxu0 0
    %754 = vmatprep.subr.bf16.mxu0 0
    %755 = vmatpush2.bf16.xpose.msra.mxu0 0
    %756 = vmatprep.subr.bf16.mxu0 0
    %757 = vmatpush2.bf16.xpose.msra.mxu0 0
    %758 = vmatprep.subr.bf16.mxu0 0
    %759 = vmatpush2.bf16.xpose.msra.mxu0 0
    %760 = vmatprep.subr.bf16.mxu0 0
    %761 = vmatpush2.bf16.xpose.msra.mxu0 0
    %762 = vmatprep.mubr.bf16.mxu0 0
    %763 = vmatmul.mubr.bf16.gmra.mxu0 %v725
    %v764 = vpop.f32.mrf.mxu0
    %v765 = vadd.f32 %v124, %v764
    %v766 = vpop.f32.mrf.mxu0
    %v767 = vpop.f32.mrf.mxu0
    %v768 = vpop.f32.mrf.mxu0
    %769 = vdwg.mxu0
    %v770 = vsel %vm132, %v715, -inf
    %771 = vmax.xlane.f32.xlu0 %v770
    %v772 = vpop.xlane.xlu0 %771
    %v773 = vsel %vm132, %v765, -inf
    %774 = vmax.xlane.f32.xlu0 %v773
    %v775 = vpop.xlane.xlu0 %774
    %v776 = vsub.f32 %v715, %v772
    %v777 = vsub.f32 %v765, %v775
    %v778 = vmul.f32 %v776, 1.442695
    %v779 = vpow.pop %v778
    %v780 = vmul.f32 %v777, 1.442695
    %v781 = vpow.pop %v780
    %v782 = vsel %vm132, %v779, 0.0
    %783 = vadd.xlane.f32.xlu0 %v782
    %v784 = vpop.xlane.xlu0 %783
    %v785 = vsel %vm132, %v781, 0.0
    %786 = vadd.xlane.f32.xlu0 %v785
    %v787 = vpop.xlane.xlu0 %786
    %v788 = vrcp.pop %v784
    %v789 = vrcp.pop %v787
    %v790 = vmul.f32 %v779, %v788
    %v791 = vmul.f32 %v781, %v789
    %v792 = vpack.c.bf16 %v790, %v790
    %v793 = vpack.c.bf16 %v791, %v791
    %794 = vrot.lane.b32.xlu0 %v127, 48
    %v795 = vpop.permute.xlu0 %794
    %v797 = vsel %vm132, %v792, 0
    %v800 = vsel %vm257, %v795, 0
    %802 = vmatprep.subr.bf16.mxu0 0
    %803 = vmatpush1.bf16.msra.mxu0 0
    %804 = vmatprep.subr.bf16.mxu0 0
    %805 = vmatpush1.bf16.msra.mxu0 0
    %806 = vmatprep.subr.bf16.mxu0 0
    %807 = vmatpush1.bf16.msra.mxu0 0
    %808 = vmatprep.subr.bf16.mxu0 0
    %809 = vmatpush1.bf16.msra.mxu0 0
    %810 = vmatprep.subr.bf16.mxu0 0
    %811 = vmatpush1.bf16.msra.mxu0 0
    %812 = vmatprep.subr.bf16.mxu0 0
    %813 = vmatpush1.bf16.msra.mxu0 0
    %814 = vmatprep.subr.bf16.mxu0 0
    %815 = vmatpush1.bf16.msra.mxu0 0
    %816 = vmatprep.subr.bf16.mxu0 0
    %817 = vmatpush1.bf16.msra.mxu0 %v800
    %818 = vmatprep.subr.bf16.mxu0 0
    %819 = vmatpush2.bf16.msra.mxu0 0
    %820 = vmatprep.subr.bf16.mxu0 0
    %821 = vmatpush2.bf16.msra.mxu0 0
    %822 = vmatprep.subr.bf16.mxu0 0
    %823 = vmatpush2.bf16.msra.mxu0 0
    %824 = vmatprep.subr.bf16.mxu0 0
    %825 = vmatpush2.bf16.msra.mxu0 0
    %826 = vmatprep.subr.bf16.mxu0 0
    %827 = vmatpush2.bf16.msra.mxu0 0
    %828 = vmatprep.subr.bf16.mxu0 0
    %829 = vmatpush2.bf16.msra.mxu0 0
    %830 = vmatprep.subr.bf16.mxu0 0
    %831 = vmatpush2.bf16.msra.mxu0 0
    %832 = vmatprep.subr.bf16.mxu0 0
    %833 = vmatpush2.bf16.msra.mxu0 0
    %834 = vmatprep.mubr.bf16.mxu0 0
    %835 = vmatmul.mubr.bf16.gmra.mxu0 %v797
    %v836 = vpop.f32.mrf.mxu0
    %v837 = vadd.f32 0.0, %v836
    %v838 = vpop.f32.mrf.mxu0
    %v839 = vpop.f32.mrf.mxu0
    %v840 = vpop.f32.mrf.mxu0
    %841 = vdwg.mxu0
    %842 = vrot.lane.b32.xlu0 %v128, 48
    %v843 = vpop.permute.xlu0 %842
    %v845 = vsel %vm132, %v793, 0
    %v848 = vsel %vm257, %v843, 0
    %850 = vmatprep.subr.bf16.mxu0 0
    %851 = vmatpush1.bf16.msra.mxu0 0
    %852 = vmatprep.subr.bf16.mxu0 0
    %853 = vmatpush1.bf16.msra.mxu0 0
    %854 = vmatprep.subr.bf16.mxu0 0
    %855 = vmatpush1.bf16.msra.mxu0 0
    %856 = vmatprep.subr.bf16.mxu0 0
    %857 = vmatpush1.bf16.msra.mxu0 0
    %858 = vmatprep.subr.bf16.mxu0 0
    %859 = vmatpush1.bf16.msra.mxu0 0
    %860 = vmatprep.subr.bf16.mxu0 0
    %861 = vmatpush1.bf16.msra.mxu0 0
    %862 = vmatprep.subr.bf16.mxu0 0
    %863 = vmatpush1.bf16.msra.mxu0 0
    %864 = vmatprep.subr.bf16.mxu0 0
    %865 = vmatpush1.bf16.msra.mxu0 %v848
    %866 = vmatprep.subr.bf16.mxu0 0
    %867 = vmatpush2.bf16.msra.mxu0 0
    %868 = vmatprep.subr.bf16.mxu0 0
    %869 = vmatpush2.bf16.msra.mxu0 0
    %870 = vmatprep.subr.bf16.mxu0 0
    %871 = vmatpush2.bf16.msra.mxu0 0
    %872 = vmatprep.subr.bf16.mxu0 0
    %873 = vmatpush2.bf16.msra.mxu0 0
    %874 = vmatprep.subr.bf16.mxu0 0
    %875 = vmatpush2.bf16.msra.mxu0 0
    %876 = vmatprep.subr.bf16.mxu0 0
    %877 = vmatpush2.bf16.msra.mxu0 0
    %878 = vmatprep.subr.bf16.mxu0 0
    %879 = vmatpush2.bf16.msra.mxu0 0
    %880 = vmatprep.subr.bf16.mxu0 0
    %881 = vmatpush2.bf16.msra.mxu0 0
    %882 = vmatprep.mubr.bf16.mxu0 0
    %883 = vmatmul.mubr.bf16.gmra.mxu0 %v845
    %v884 = vpop.f32.mrf.mxu0
    %v885 = vadd.f32 0.0, %v884
    %v886 = vpop.f32.mrf.mxu0
    %v887 = vpop.f32.mrf.mxu0
    %v888 = vpop.f32.mrf.mxu0
    %889 = vdwg.mxu0
    %v890 = vpack.c.bf16 %v885, %v837
    %s891 = scalar_lea.vmem %s3, 8
    %v892 = vld [vmem:[%s891] sm:$0xf]
    %v894 = vsel %vm132, %v890, 0
    %v897 = vsel %vm257, %v892, 0
    %899 = vmatprep.subr.bf16.mxu0 0
    %900 = vmatpush1.bf16.msra.mxu0 0
    %901 = vmatprep.subr.bf16.mxu0 0
    %902 = vmatpush1.bf16.msra.mxu0 0
    %903 = vmatprep.subr.bf16.mxu0 0
    %904 = vmatpush1.bf16.msra.mxu0 0
    %905 = vmatprep.subr.bf16.mxu0 0
    %906 = vmatpush1.bf16.msra.mxu0 0
    %907 = vmatprep.subr.bf16.mxu0 0
    %908 = vmatpush1.bf16.msra.mxu0 0
    %909 = vmatprep.subr.bf16.mxu0 0
    %910 = vmatpush1.bf16.msra.mxu0 0
    %911 = vmatprep.subr.bf16.mxu0 0
    %912 = vmatpush1.bf16.msra.mxu0 0
    %913 = vmatprep.subr.bf16.mxu0 0
    %914 = vmatpush1.bf16.msra.mxu0 %v897
    %915 = vmatprep.subr.bf16.mxu0 0
    %916 = vmatpush2.bf16.msra.mxu0 0
    %917 = vmatprep.subr.bf16.mxu0 0
    %918 = vmatpush2.bf16.msra.mxu0 0
    %919 = vmatprep.subr.bf16.mxu0 0
    %920 = vmatpush2.bf16.msra.mxu0 0
    %921 = vmatprep.subr.bf16.mxu0 0
    %922 = vmatpush2.bf16.msra.mxu0 0
    %923 = vmatprep.subr.bf16.mxu0 0
    %924 = vmatpush2.bf16.msra.mxu0 0
    %925 = vmatprep.subr.bf16.mxu0 0
    %926 = vmatpush2.bf16.msra.mxu0 0
    %927 = vmatprep.subr.bf16.mxu0 0
    %928 = vmatpush2.bf16.msra.mxu0 0
    %929 = vmatprep.subr.bf16.mxu0 0
    %930 = vmatpush2.bf16.msra.mxu0 0
    %931 = vmatprep.mubr.bf16.mxu0 0
    %932 = vmatmul.mubr.bf16.gmra.mxu0 %v894
    %v933 = vpop.f32.mrf.mxu0
    %v934 = vadd.f32 0.0, %v933
    %v935 = vpop.f32.mrf.mxu0
    %v936 = vpop.f32.mrf.mxu0
    %v937 = vadd.f32 0.0, %v936
    %v938 = vpop.f32.mrf.mxu0
    %939 = vdwg.mxu0
    %v940 = vadd.f32 %v664, %v934
    %v941 = vadd.f32 %v667, %v937
    %942 = vrot.lane.b32.xlu0 %v125, 104
    %v943 = vpop.permute.xlu0 %942
    %944 = vrot.lane.b32.xlu0 %v127, 72
    %v945 = vpop.permute.xlu0 %944
    %v947 = vsel %vm132, %v943, 0
    %v950 = vsel %vm132, %v945, 0
    %952 = vmatprep.subr.bf16.mxu0 0
    %953 = vmatpush1.bf16.xpose.msra.mxu0 0
    %954 = vmatprep.subr.bf16.mxu0 0
    %955 = vmatpush1.bf16.xpose.msra.mxu0 0
    %956 = vmatprep.subr.bf16.mxu0 0
    %957 = vmatpush1.bf16.xpose.msra.mxu0 0
    %958 = vmatprep.subr.bf16.mxu0 0
    %959 = vmatpush1.bf16.xpose.msra.mxu0 0
    %960 = vmatprep.subr.bf16.mxu0 0
    %961 = vmatpush1.bf16.xpose.msra.mxu0 0
    %962 = vmatprep.subr.bf16.mxu0 0
    %963 = vmatpush1.bf16.xpose.msra.mxu0 0
    %964 = vmatprep.subr.bf16.mxu0 0
    %965 = vmatpush1.bf16.xpose.msra.mxu0 0
    %966 = vmatprep.subr.bf16.mxu0 0
    %967 = vmatpush1.bf16.xpose.msra.mxu0 %v950
    %968 = vmatprep.subr.bf16.mxu0 0
    %969 = vmatpush2.bf16.xpose.msra.mxu0 0
    %970 = vmatprep.subr.bf16.mxu0 0
    %971 = vmatpush2.bf16.xpose.msra.mxu0 0
    %972 = vmatprep.subr.bf16.mxu0 0
    %973 = vmatpush2.bf16.xpose.msra.mxu0 0
    %974 = vmatprep.subr.bf16.mxu0 0
    %975 = vmatpush2.bf16.xpose.msra.mxu0 0
    %976 = vmatprep.subr.bf16.mxu0 0
    %977 = vmatpush2.bf16.xpose.msra.mxu0 0
    %978 = vmatprep.subr.bf16.mxu0 0
    %979 = vmatpush2.bf16.xpose.msra.mxu0 0
    %980 = vmatprep.subr.bf16.mxu0 0
    %981 = vmatpush2.bf16.xpose.msra.mxu0 0
    %982 = vmatprep.subr.bf16.mxu0 0
    %983 = vmatpush2.bf16.xpose.msra.mxu0 0
    %984 = vmatprep.mubr.bf16.mxu0 0
    %985 = vmatmul.mubr.bf16.gmra.mxu0 %v947
    %v986 = vpop.f32.mrf.mxu0
    %v987 = vadd.f32 %v124, %v986
    %v988 = vpop.f32.mrf.mxu0
    %v989 = vpop.f32.mrf.mxu0
    %v990 = vpop.f32.mrf.mxu0
    %991 = vdwg.mxu0
    %992 = vrot.lane.b32.xlu0 %v126, 104
    %v993 = vpop.permute.xlu0 %992
    %994 = vrot.lane.b32.xlu0 %v128, 72
    %v995 = vpop.permute.xlu0 %994
    %v997 = vsel %vm132, %v993, 0
    %v1000 = vsel %vm132, %v995, 0
    %1002 = vmatprep.subr.bf16.mxu0 0
    %1003 = vmatpush1.bf16.xpose.msra.mxu0 0
    %1004 = vmatprep.subr.bf16.mxu0 0
    %1005 = vmatpush1.bf16.xpose.msra.mxu0 0
    %1006 = vmatprep.subr.bf16.mxu0 0
    %1007 = vmatpush1.bf16.xpose.msra.mxu0 0
    %1008 = vmatprep.subr.bf16.mxu0 0
    %1009 = vmatpush1.bf16.xpose.msra.mxu0 0
    %1010 = vmatprep.subr.bf16.mxu0 0
    %1011 = vmatpush1.bf16.xpose.msra.mxu0 0
    %1012 = vmatprep.subr.bf16.mxu0 0
    %1013 = vmatpush1.bf16.xpose.msra.mxu0 0
    %1014 = vmatprep.subr.bf16.mxu0 0
    %1015 = vmatpush1.bf16.xpose.msra.mxu0 0
    %1016 = vmatprep.subr.bf16.mxu0 0
    %1017 = vmatpush1.bf16.xpose.msra.mxu0 %v1000
    %1018 = vmatprep.subr.bf16.mxu0 0
    %1019 = vmatpush2.bf16.xpose.msra.mxu0 0
    %1020 = vmatprep.subr.bf16.mxu0 0
    %1021 = vmatpush2.bf16.xpose.msra.mxu0 0
    %1022 = vmatprep.subr.bf16.mxu0 0
    %1023 = vmatpush2.bf16.xpose.msra.mxu0 0
    %1024 = vmatprep.subr.bf16.mxu0 0
    %1025 = vmatpush2.bf16.xpose.msra.mxu0 0
    %1026 = vmatprep.subr.bf16.mxu0 0
    %1027 = vmatpush2.bf16.xpose.msra.mxu0 0
    %1028 = vmatprep.subr.bf16.mxu0 0
    %1029 = vmatpush2.bf16.xpose.msra.mxu0 0
    %1030 = vmatprep.subr.bf16.mxu0 0
    %1031 = vmatpush2.bf16.xpose.msra.mxu0 0
    %1032 = vmatprep.subr.bf16.mxu0 0
    %1033 = vmatpush2.bf16.xpose.msra.mxu0 0
    %1034 = vmatprep.mubr.bf16.mxu0 0
    %1035 = vmatmul.mubr.bf16.gmra.mxu0 %v997
    %v1036 = vpop.f32.mrf.mxu0
    %v1037 = vadd.f32 %v124, %v1036
    %v1038 = vpop.f32.mrf.mxu0
    %v1039 = vpop.f32.mrf.mxu0
    %v1040 = vpop.f32.mrf.mxu0
    %1041 = vdwg.mxu0
    %v1042 = vsel %vm132, %v987, -inf
    %1043 = vmax.xlane.f32.xlu0 %v1042
    %v1044 = vpop.xlane.xlu0 %1043
    %v1045 = vsel %vm132, %v1037, -inf
    %1046 = vmax.xlane.f32.xlu0 %v1045
    %v1047 = vpop.xlane.xlu0 %1046
    %v1048 = vsub.f32 %v987, %v1044
    %v1049 = vsub.f32 %v1037, %v1047
    %v1050 = vmul.f32 %v1048, 1.442695
    %v1051 = vpow.pop %v1050
    %v1052 = vmul.f32 %v1049, 1.442695
    %v1053 = vpow.pop %v1052
    %v1054 = vsel %vm132, %v1051, 0.0
    %1055 = vadd.xlane.f32.xlu0 %v1054
    %v1056 = vpop.xlane.xlu0 %1055
    %v1057 = vsel %vm132, %v1053, 0.0
    %1058 = vadd.xlane.f32.xlu0 %v1057
    %v1059 = vpop.xlane.xlu0 %1058
    %v1060 = vrcp.pop %v1056
    %v1061 = vrcp.pop %v1059
    %v1062 = vmul.f32 %v1051, %v1060
    %v1063 = vmul.f32 %v1053, %v1061
    %v1064 = vpack.c.bf16 %v1062, %v1062
    %v1065 = vpack.c.bf16 %v1063, %v1063
    %1066 = vrot.lane.b32.xlu0 %v127, 40
    %v1067 = vpop.permute.xlu0 %1066
    %v1069 = vsel %vm132, %v1064, 0
    %v1072 = vsel %vm257, %v1067, 0
    %1074 = vmatprep.subr.bf16.mxu0 0
    %1075 = vmatpush1.bf16.msra.mxu0 0
    %1076 = vmatprep.subr.bf16.mxu0 0
    %1077 = vmatpush1.bf16.msra.mxu0 0
    %1078 = vmatprep.subr.bf16.mxu0 0
    %1079 = vmatpush1.bf16.msra.mxu0 0
    %1080 = vmatprep.subr.bf16.mxu0 0
    %1081 = vmatpush1.bf16.msra.mxu0 0
    %1082 = vmatprep.subr.bf16.mxu0 0
    %1083 = vmatpush1.bf16.msra.mxu0 0
    %1084 = vmatprep.subr.bf16.mxu0 0
    %1085 = vmatpush1.bf16.msra.mxu0 0
    %1086 = vmatprep.subr.bf16.mxu0 0
    %1087 = vmatpush1.bf16.msra.mxu0 0
    %1088 = vmatprep.subr.bf16.mxu0 0
    %1089 = vmatpush1.bf16.msra.mxu0 %v1072
    %1090 = vmatprep.subr.bf16.mxu0 0
    %1091 = vmatpush2.bf16.msra.mxu0 0
    %1092 = vmatprep.subr.bf16.mxu0 0
    %1093 = vmatpush2.bf16.msra.mxu0 0
    %1094 = vmatprep.subr.bf16.mxu0 0
    %1095 = vmatpush2.bf16.msra.mxu0 0
    %1096 = vmatprep.subr.bf16.mxu0 0
    %1097 = vmatpush2.bf16.msra.mxu0 0
    %1098 = vmatprep.subr.bf16.mxu0 0
    %1099 = vmatpush2.bf16.msra.mxu0 0
    %1100 = vmatprep.subr.bf16.mxu0 0
    %1101 = vmatpush2.bf16.msra.mxu0 0
    %1102 = vmatprep.subr.bf16.mxu0 0
    %1103 = vmatpush2.bf16.msra.mxu0 0
    %1104 = vmatprep.subr.bf16.mxu0 0
    %1105 = vmatpush2.bf16.msra.mxu0 0
    %1106 = vmatprep.mubr.bf16.mxu0 0
    %1107 = vmatmul.mubr.bf16.gmra.mxu0 %v1069
    %v1108 = vpop.f32.mrf.mxu0
    %v1109 = vadd.f32 0.0, %v1108
    %v1110 = vpop.f32.mrf.mxu0
    %v1111 = vpop.f32.mrf.mxu0
    %v1112 = vpop.f32.mrf.mxu0
    %1113 = vdwg.mxu0
    %1114 = vrot.lane.b32.xlu0 %v128, 40
    %v1115 = vpop.permute.xlu0 %1114
    %v1117 = vsel %vm132, %v1065, 0
    %v1120 = vsel %vm257, %v1115, 0
    %1122 = vmatprep.subr.bf16.mxu0 0
    %1123 = vmatpush1.bf16.msra.mxu0 0
    %1124 = vmatprep.subr.bf16.mxu0 0
    %1125 = vmatpush1.bf16.msra.mxu0 0
    %1126 = vmatprep.subr.bf16.mxu0 0
    %1127 = vmatpush1.bf16.msra.mxu0 0
    %1128 = vmatprep.subr.bf16.mxu0 0
    %1129 = vmatpush1.bf16.msra.mxu0 0
    %1130 = vmatprep.subr.bf16.mxu0 0
    %1131 = vmatpush1.bf16.msra.mxu0 0
    %1132 = vmatprep.subr.bf16.mxu0 0
    %1133 = vmatpush1.bf16.msra.mxu0 0
    %1134 = vmatprep.subr.bf16.mxu0 0
    %1135 = vmatpush1.bf16.msra.mxu0 0
    %1136 = vmatprep.subr.bf16.mxu0 0
    %1137 = vmatpush1.bf16.msra.mxu0 %v1120
    %1138 = vmatprep.subr.bf16.mxu0 0
    %1139 = vmatpush2.bf16.msra.mxu0 0
    %1140 = vmatprep.subr.bf16.mxu0 0
    %1141 = vmatpush2.bf16.msra.mxu0 0
    %1142 = vmatprep.subr.bf16.mxu0 0
    %1143 = vmatpush2.bf16.msra.mxu0 0
    %1144 = vmatprep.subr.bf16.mxu0 0
    %1145 = vmatpush2.bf16.msra.mxu0 0
    %1146 = vmatprep.subr.bf16.mxu0 0
    %1147 = vmatpush2.bf16.msra.mxu0 0
    %1148 = vmatprep.subr.bf16.mxu0 0
    %1149 = vmatpush2.bf16.msra.mxu0 0
    %1150 = vmatprep.subr.bf16.mxu0 0
    %1151 = vmatpush2.bf16.msra.mxu0 0
    %1152 = vmatprep.subr.bf16.mxu0 0
    %1153 = vmatpush2.bf16.msra.mxu0 0
    %1154 = vmatprep.mubr.bf16.mxu0 0
    %1155 = vmatmul.mubr.bf16.gmra.mxu0 %v1117
    %v1156 = vpop.f32.mrf.mxu0
    %v1157 = vadd.f32 0.0, %v1156
    %v1158 = vpop.f32.mrf.mxu0
    %v1159 = vpop.f32.mrf.mxu0
    %v1160 = vpop.f32.mrf.mxu0
    %1161 = vdwg.mxu0
    %v1162 = vpack.c.bf16 %v1157, %v1109
    %s1163 = scalar_lea.vmem %s3, 12
    %v1164 = vld [vmem:[%s1163] sm:$0xf]
    %v1166 = vsel %vm132, %v1162, 0
    %v1169 = vsel %vm257, %v1164, 0
    %1171 = vmatprep.subr.bf16.mxu0 0
    %1172 = vmatpush1.bf16.msra.mxu0 0
    %1173 = vmatprep.subr.bf16.mxu0 0
    %1174 = vmatpush1.bf16.msra.mxu0 0
    %1175 = vmatprep.subr.bf16.mxu0 0
    %1176 = vmatpush1.bf16.msra.mxu0 0
    %1177 = vmatprep.subr.bf16.mxu0 0
    %1178 = vmatpush1.bf16.msra.mxu0 0
    %1179 = vmatprep.subr.bf16.mxu0 0
    %1180 = vmatpush1.bf16.msra.mxu0 0
    %1181 = vmatprep.subr.bf16.mxu0 0
    %1182 = vmatpush1.bf16.msra.mxu0 0
    %1183 = vmatprep.subr.bf16.mxu0 0
    %1184 = vmatpush1.bf16.msra.mxu0 0
    %1185 = vmatprep.subr.bf16.mxu0 0
    %1186 = vmatpush1.bf16.msra.mxu0 %v1169
    %1187 = vmatprep.subr.bf16.mxu0 0
    %1188 = vmatpush2.bf16.msra.mxu0 0
    %1189 = vmatprep.subr.bf16.mxu0 0
    %1190 = vmatpush2.bf16.msra.mxu0 0
    %1191 = vmatprep.subr.bf16.mxu0 0
    %1192 = vmatpush2.bf16.msra.mxu0 0
    %1193 = vmatprep.subr.bf16.mxu0 0
    %1194 = vmatpush2.bf16.msra.mxu0 0
    %1195 = vmatprep.subr.bf16.mxu0 0
    %1196 = vmatpush2.bf16.msra.mxu0 0
    %1197 = vmatprep.subr.bf16.mxu0 0
    %1198 = vmatpush2.bf16.msra.mxu0 0
    %1199 = vmatprep.subr.bf16.mxu0 0
    %1200 = vmatpush2.bf16.msra.mxu0 0
    %1201 = vmatprep.subr.bf16.mxu0 0
    %1202 = vmatpush2.bf16.msra.mxu0 0
    %1203 = vmatprep.mubr.bf16.mxu0 0
    %1204 = vmatmul.mubr.bf16.gmra.mxu0 %v1166
    %v1205 = vpop.f32.mrf.mxu0
    %v1206 = vadd.f32 0.0, %v1205
    %v1207 = vpop.f32.mrf.mxu0
    %v1208 = vpop.f32.mrf.mxu0
    %v1209 = vadd.f32 0.0, %v1208
    %v1210 = vpop.f32.mrf.mxu0
    %1211 = vdwg.mxu0
    %v1212 = vadd.f32 %v940, %v1206
    %v1213 = vadd.f32 %v941, %v1209
    %v1214 = vld [vmem:[%s4] sm:$0x1]
    %v1216 = vlaneseq
    %v1217 = vshrl.u32 %v1216, 7
    %v1218 = vsub.s32 0, %v1217
    %v1219 = vrot.slane %v1214, %v1218
    %v1221 = vadd.f32 %v1212, %v1219
    %v1222 = vadd.f32 %v1213, %v1219
    %v1223 = vadd.f32 %v46, %v1221
    %v1224 = vadd.f32 %v47, %v1222
    %v1225 = vld [vmem:[%s5] sm:$0x1]
    %v1226 = vld [vmem:[%s6] sm:$0x1]
    %v1227 = vsel %vm72, %v1223, 0.0
    %1228 = vadd.xlane.f32.xlu0 %v1227
    %v1229 = vpop.xlane.xlu0 %1228
    %v1230 = vsel %vm72, %v1224, 0.0
    %1231 = vadd.xlane.f32.xlu0 %v1230
    %v1232 = vpop.xlane.xlu0 %1231
    %v1233 = vrcp.pop 32.0
    %v1234 = vmul.f32 %v1229, %v1233
    %v1235 = vmul.f32 %v1232, %v1233
    %v1236 = vsub.f32 %v1223, %v1234
    %v1237 = vsub.f32 %v1224, %v1235
    %v1238 = vmul.f32 %v1236, %v1236
    %v1239 = vmul.f32 %v1237, %v1237
    %v1240 = vsel %vm72, %v1238, 0.0
    %1241 = vadd.xlane.f32.xlu0 %v1240
    %v1242 = vpop.xlane.xlu0 %1241
    %v1243 = vsel %vm72, %v1239, 0.0
    %1244 = vadd.xlane.f32.xlu0 %v1243
    %v1245 = vpop.xlane.xlu0 %1244
    %v1246 = vmul.f32 %v1242, %v1233
    %v1247 = vmul.f32 %v1245, %v1233
    %v1248 = vadd.f32 %v1246, 1e-05
    %v1249 = vadd.f32 %v1247, 1e-05
    %v1250 = vrsqrt.pop %v1248
    %v1251 = vrsqrt.pop %v1249
    %v1252 = vmul.f32 %v1236, %v1250
    %v1253 = vmul.f32 %v1237, %v1251
    %v1255 = vlaneseq
    %v1256 = vshrl.u32 %v1255, 7
    %v1257 = vsub.s32 0, %v1256
    %v1258 = vrot.slane %v1225, %v1257
    %v1260 = vmul.f32 %v1252, %v1258
    %v1261 = vmul.f32 %v1253, %v1258
    %v1263 = vlaneseq
    %v1264 = vshrl.u32 %v1263, 7
    %v1265 = vsub.s32 0, %v1264
    %v1266 = vrot.slane %v1226, %v1265
    %v1268 = vadd.f32 %v1260, %v1266
    %v1269 = vadd.f32 %v1261, %v1266
    %v1270 = vpack.c.bf16 %v1269, %v1268
    %v1271 = vld [vmem:[%s7] sm:$0xf]
    %v1272 = vld [vmem:[%s7 + $0x4] sm:$0xf]
    %v1273 = vld [vmem:[%s7 + $0x8] sm:$0xf]
    %v1274 = vld [vmem:[%s7 + $0xc] sm:$0xf]
    %v1275 = vld [vmem:[%s8] sm:$0x1]
    %v1277 = vlaneseq
    %v1278 = vshrl.u32 %v1277, 7
    %v1279 = vsub.s32 0, %v1278
    %v1280 = vrot.slane %v1275, %v1279
    %v1286 = vunpack.c.l.b16 %v1271
    %v1287 = vunpack.c.l.b16 %v1272
    %v1288 = vunpack.c.l.b16 %v1273
    %v1289 = vunpack.c.l.b16 %v1274
    %v1290 = vpack.c.b16 %v1287, %v1286
    %v1291 = vpack.c.b16 %v1289, %v1288
    %v1295 = vsel %vm72, %v1270, 0
    %1297 = vmatprep.subr.bf16.mxu0 0
    %1298 = vmatpush1.bf16.msra.mxu0 0
    %1299 = vmatprep.subr.bf16.mxu0 0
    %1300 = vmatpush1.bf16.msra.mxu0 0
    %1301 = vmatprep.subr.bf16.mxu0 0
    %1302 = vmatpush1.bf16.msra.mxu0 0
    %1303 = vmatprep.subr.bf16.mxu0 0
    %1304 = vmatpush1.bf16.msra.mxu0 0
    %1305 = vmatprep.subr.bf16.mxu0 0
    %1306 = vmatpush1.bf16.msra.mxu0 0
    %1307 = vmatprep.subr.bf16.mxu0 0
    %1308 = vmatpush1.bf16.msra.mxu0 0
    %1309 = vmatprep.subr.bf16.mxu0 0
    %1310 = vmatpush1.bf16.msra.mxu0 %v1291
    %1311 = vmatprep.subr.bf16.mxu0 0
    %1312 = vmatpush1.bf16.msra.mxu0 %v1290
    %1313 = vmatprep.subr.bf16.mxu0 0
    %1314 = vmatpush2.bf16.msra.mxu0 0
    %1315 = vmatprep.subr.bf16.mxu0 0
    %1316 = vmatpush2.bf16.msra.mxu0 0
    %1317 = vmatprep.subr.bf16.mxu0 0
    %1318 = vmatpush2.bf16.msra.mxu0 0
    %1319 = vmatprep.subr.bf16.mxu0 0
    %1320 = vmatpush2.bf16.msra.mxu0 0
    %1321 = vmatprep.subr.bf16.mxu0 0
    %1322 = vmatpush2.bf16.msra.mxu0 0
    %1323 = vmatprep.subr.bf16.mxu0 0
    %1324 = vmatpush2.bf16.msra.mxu0 0
    %1325 = vmatprep.subr.bf16.mxu0 0
    %1326 = vmatpush2.bf16.msra.mxu0 0
    %1327 = vmatprep.subr.bf16.mxu0 0
    %1328 = vmatpush2.bf16.msra.mxu0 0
    %1329 = vmatprep.mubr.bf16.mxu0 0
    %1330 = vmatmul.mubr.bf16.gmra.mxu0 %v1295
    %v1331 = vpop.f32.mrf.mxu0
    %v1332 = vadd.f32 %v1280, %v1331
    %v1333 = vpop.f32.mrf.mxu0
    %v1334 = vpop.f32.mrf.mxu0
    %v1335 = vadd.f32 %v1280, %v1334
    %v1336 = vpop.f32.mrf.mxu0
    %1337 = vdwg.mxu0
    %v1338 = vmul.f32 %v1332, 0.5
    %v1339 = vmul.f32 %v1335, 0.5
    %v1340 = vmul.f32 %v1332, 0.70710677
    %v1341 = vmul.f32 %v1335, 0.70710677
    %v1342 = verf.f32.pop %v1340
    %v1343 = verf.f32.pop %v1341
    %v1344 = vadd.f32 %v1342, 1.0
    %v1345 = vadd.f32 %v1343, 1.0
    %v1346 = vmul.f32 %v1338, %v1344
    %v1347 = vmul.f32 %v1339, %v1345
    %v1348 = vpack.c.bf16 %v1347, %v1346
    %v1349 = vld [vmem:[%s9] sm:$0xf]
    %v1350 = vld [vmem:[%s9 + $0x4] sm:$0xf]
    %v1351 = vld [vmem:[%s9 + $0x8] sm:$0xf]
    %v1352 = vld [vmem:[%s9 + $0xc] sm:$0xf]
    %v1353 = vld [vmem:[%s9 + $0x10] sm:$0xf]
    %v1354 = vld [vmem:[%s9 + $0x14] sm:$0xf]
    %v1355 = vld [vmem:[%s9 + $0x18] sm:$0xf]
    %v1356 = vld [vmem:[%s9 + $0x1c] sm:$0xf]
    %v1357 = vld [vmem:[%s9 + $0x20] sm:$0xf]
    %v1358 = vld [vmem:[%s9 + $0x24] sm:$0xf]
    %v1359 = vld [vmem:[%s9 + $0x28] sm:$0xf]
    %v1360 = vld [vmem:[%s9 + $0x2c] sm:$0xf]
    %v1361 = vld [vmem:[%s9 + $0x30] sm:$0xf]
    %v1362 = vld [vmem:[%s9 + $0x34] sm:$0xf]
    %v1363 = vld [vmem:[%s9 + $0x38] sm:$0xf]
    %v1364 = vld [vmem:[%s9 + $0x3c] sm:$0xf]
    %v1365 = vld [vmem:[%s10] sm:$0x1]
    %v1367 = vlaneseq
    %v1368 = vshrl.u32 %v1367, 7
    %v1369 = vsub.s32 0, %v1368
    %v1370 = vrot.slane %v1365, %v1369
    %v1388 = vunpack.c.l.b16 %v1349
    %v1389 = vunpack.c.l.b16 %v1350
    %v1390 = vunpack.c.l.b16 %v1351
    %v1391 = vunpack.c.l.b16 %v1352
    %v1392 = vunpack.c.l.b16 %v1353
    %v1393 = vunpack.c.l.b16 %v1354
    %v1394 = vunpack.c.l.b16 %v1355
    %v1395 = vunpack.c.l.b16 %v1356
    %v1396 = vunpack.c.l.b16 %v1357
    %v1397 = vunpack.c.l.b16 %v1358
    %v1398 = vunpack.c.l.b16 %v1359
    %v1399 = vunpack.c.l.b16 %v1360
    %v1400 = vunpack.c.l.b16 %v1361
    %v1401 = vunpack.c.l.b16 %v1362
    %v1402 = vunpack.c.l.b16 %v1363
    %v1403 = vunpack.c.l.b16 %v1364
    %v1404 = vpack.c.b16 %v1389, %v1388
    %v1405 = vpack.c.b16 %v1391, %v1390
    %v1406 = vpack.c.b16 %v1393, %v1392
    %v1407 = vpack.c.b16 %v1395, %v1394
    %v1408 = vpack.c.b16 %v1397, %v1396
    %v1409 = vpack.c.b16 %v1399, %v1398
    %v1410 = vpack.c.b16 %v1401, %v1400
    %v1411 = vpack.c.b16 %v1403, %v1402
    %1420 = vmatprep.subr.bf16.mxu0 0
    %1421 = vmatpush1.bf16.msra.mxu0 %v1411
    %1422 = vmatprep.subr.bf16.mxu0 0
    %1423 = vmatpush1.bf16.msra.mxu0 %v1410
    %1424 = vmatprep.subr.bf16.mxu0 0
    %1425 = vmatpush1.bf16.msra.mxu0 %v1409
    %1426 = vmatprep.subr.bf16.mxu0 0
    %1427 = vmatpush1.bf16.msra.mxu0 %v1408
    %1428 = vmatprep.subr.bf16.mxu0 0
    %1429 = vmatpush1.bf16.msra.mxu0 %v1407
    %1430 = vmatprep.subr.bf16.mxu0 0
    %1431 = vmatpush1.bf16.msra.mxu0 %v1406
    %1432 = vmatprep.subr.bf16.mxu0 0
    %1433 = vmatpush1.bf16.msra.mxu0 %v1405
    %1434 = vmatprep.subr.bf16.mxu0 0
    %1435 = vmatpush1.bf16.msra.mxu0 %v1404
    %1436 = vmatprep.subr.bf16.mxu0 0
    %1437 = vmatpush2.bf16.msra.mxu0 0
    %1438 = vmatprep.subr.bf16.mxu0 0
    %1439 = vmatpush2.bf16.msra.mxu0 0
    %1440 = vmatprep.subr.bf16.mxu0 0
    %1441 = vmatpush2.bf16.msra.mxu0 0
    %1442 = vmatprep.subr.bf16.mxu0 0
    %1443 = vmatpush2.bf16.msra.mxu0 0
    %1444 = vmatprep.subr.bf16.mxu0 0
    %1445 = vmatpush2.bf16.msra.mxu0 0
    %1446 = vmatprep.subr.bf16.mxu0 0
    %1447 = vmatpush2.bf16.msra.mxu0 0
    %1448 = vmatprep.subr.bf16.mxu0 0
    %1449 = vmatpush2.bf16.msra.mxu0 0
    %1450 = vmatprep.subr.bf16.mxu0 0
    %1451 = vmatpush2.bf16.msra.mxu0 0
    %1452 = vmatprep.mubr.bf16.mxu0 0
    %1453 = vmatmul.mubr.bf16.gmra.mxu0 %v1348
    %v1454 = vpop.f32.mrf.mxu0
    %v1455 = vadd.f32 %v1370, %v1454
    %v1456 = vpop.f32.mrf.mxu0
    %v1457 = vpop.f32.mrf.mxu0
    %v1458 = vadd.f32 %v1370, %v1457
    %v1459 = vpop.f32.mrf.mxu0
    %1460 = vdwg.mxu0
    %v1461 = vadd.f32 %v1268, %v1455
    %v1462 = vadd.f32 %v1269, %v1458
    %v1463 = vld [vmem:[%s11] sm:$0x1]
    %v1464 = vld [vmem:[%s12] sm:$0x1]
    %v1465 = vsel %vm72, %v1461, 0.0
    %1466 = vadd.xlane.f32.xlu0 %v1465
    %v1467 = vpop.xlane.xlu0 %1466
    %v1468 = vsel %vm72, %v1462, 0.0
    %1469 = vadd.xlane.f32.xlu0 %v1468
    %v1470 = vpop.xlane.xlu0 %1469
    %v1471 = vmul.f32 %v1467, %v1233
    %v1472 = vmul.f32 %v1470, %v1233
    %v1473 = vsub.f32 %v1461, %v1471
    %v1474 = vsub.f32 %v1462, %v1472
    %v1475 = vmul.f32 %v1473, %v1473
    %v1476 = vmul.f32 %v1474, %v1474
    %v1477 = vsel %vm72, %v1475, 0.0
    %1478 = vadd.xlane.f32.xlu0 %v1477
    %v1479 = vpop.xlane.xlu0 %1478
    %v1480 = vsel %vm72, %v1476, 0.0
    %1481 = vadd.xlane.f32.xlu0 %v1480
    %v1482 = vpop.xlane.xlu0 %1481
    %v1483 = vmul.f32 %v1479, %v1233
    %v1484 = vmul.f32 %v1482, %v1233
    %v1485 = vadd.f32 %v1483, 1e-05
    %v1486 = vadd.f32 %v1484, 1e-05
    %v1487 = vrsqrt.pop %v1485
    %v1488 = vrsqrt.pop %v1486
    %v1489 = vmul.f32 %v1473, %v1487
    %v1490 = vmul.f32 %v1474, %v1488
    %v1492 = vlaneseq
    %v1493 = vshrl.u32 %v1492, 7
    %v1494 = vsub.s32 0, %v1493
    %v1495 = vrot.slane %v1463, %v1494
    %v1497 = vmul.f32 %v1489, %v1495
    %v1498 = vmul.f32 %v1490, %v1495
    %v1500 = vlaneseq
    %v1501 = vshrl.u32 %v1500, 7
    %v1502 = vsub.s32 0, %v1501
    %v1503 = vrot.slane %v1464, %v1502
    %v1505 = vadd.f32 %v1497, %v1503
    %v1506 = vadd.f32 %v1498, %v1503
    %1507 = vst.msk [vmem:[#allocation2] sm:$0xff] %vm72, %v1505
    %1508 = vst.msk [vmem:[#allocation2 + $0x8] sm:$0xff] %vm72, %v1506
    // Predicated region
    $region54: #{tpu_custom_call.1} parent=1 // pred_check
      _
    $region55: #{tpu_custom_call.1} parent=1 // pred_check_branch
      %1510 = sbr.rel (0) target = $region57
    $region56: #{tpu_custom_call.1} parent=1 // pred_region
      %s1512 = ssub.s32 256, 256
      %1513 = vsyncadd [#allocation3], %s1512
      %s1514 = sshll.u32 [#allocation2], 4
      %s1515 = int_to_ptr.vmem [resolvable:$true] %s1514
      %1520 = dma.vmem_to_hbm [thread:$0]  %s1515, 256, %s13, [#allocation3], 128, 128, 8
    $region57: #{tpu_custom_call.1} parent=1 // pred_fallthru
      _
    // Predicated region
    $region58: #{tpu_custom_call.1} parent=1 // pred_check
      _
    $region59: #{tpu_custom_call.1} parent=1 // pred_check_branch
      %1522 = sbr.rel (0) target = $region61
    $region60: #{tpu_custom_call.1} parent=1 // pred_region
      %1523 = dma.done [#allocation3], 256
    $region61: #{tpu_custom_call.1} parent=1 // pred_fallthru
      _
    %1524 = vsyncpa [#allocation3], 1

</llo_original>
